<compile_context>
chip_gen: v7x
topology: tpu7x:2x2x1
jax: 0.10.0
libtpu: 0.0.40
codegen_flags: <defaults>
</compile_context>

<pallas_src>
import functools
import math

import jax
import jax.numpy as jnp
from jax.experimental import pallas as pl
from jax.experimental.pallas import tpu as pltpu


LRELU_SLOPE = 0.2
BN_EPS = 1e-5


def _round_up(n, m):
    return ((n + m - 1) // m) * m


def _lrelu(x):
    return jnp.maximum(x, LRELU_SLOPE * x)


def _col_mask(tile_cols, hw_valid):
    # (1, TM) mask of pixel columns in this tile that are real (not padding).
    t = pl.program_id(1)
    cols = t * tile_cols + jax.lax.broadcasted_iota(jnp.int32, (1, tile_cols), 1)
    return cols < hw_valid


# ----------------------------------------------------------------------------
# BlockSpec helpers.  Grid = (B, T): batch index b, pixel-tile index t.
# All pixel data is channels-first (B, C, HW_pad), tiled along HW only.
# ----------------------------------------------------------------------------
def _pixel_spec(c, tm):            # (B, c, HW_pad) tiled over pixel columns
    return pl.BlockSpec((None, c, tm), lambda b, t: (b, 0, t))


def _batchvec_spec(c):             # (B, c, 1) per-batch column vector, resident
    return pl.BlockSpec((None, c, 1), lambda b, t: (b, 0, 0))


def _wspec(shape):                 # full (small) weight matrix, resident
    return pl.BlockSpec(shape, lambda b, t: (0,) * len(shape))


def _stats_spec(c):                # (B, T, c, 1) per-tile partial BN stats
    return pl.BlockSpec((None, None, c, 1), lambda b, t: (b, t, 0, 0))


# ----------------------------------------------------------------------------
# Stage 1: FiLM modulation of PE and x, split conv1 matmuls, LeakyReLU,
# per-tile BN1 partial statistics.  No concats, no (P,.) broadcasts: the
# per-batch pieces arrive as precomputed bias column-vectors.
# ----------------------------------------------------------------------------
def stage1_kernel(x_ref, pe_ref, spe_ref, hpe_ref,
                  bias_s_ref, bias_h_ref, bias1_ref,
                  wls_ref, wlh_ref, w1x_ref, w1pe_ref,
                  h_ref, sum_ref, sumsq_ref,
                  *, tile_cols, hw_valid):
    # PE' = PE * (spe + 1) + hpe      (per-batch FiLM, f32 elementwise)
    pe = pe_ref[...].astype(jnp.float32)                              # (34, TM)
    pe_mod = pe * (spe_ref[...] + 1.0) + hpe_ref[...]
    pe_bf = pe_mod.astype(jnp.bfloat16)

    # convLEPEforX split: scale/shift = wl[:34,:10/10:]^T @ PE' + per-batch bias
    # (bias = lex @ wl[34:] + bl, computed in the wrapper)
    scale = jnp.dot(wls_ref[...], pe_bf,
                    preferred_element_type=jnp.float32) + bias_s_ref[...]
    shift = jnp.dot(wlh_ref[...], pe_bf,
                    preferred_element_type=jnp.float32) + bias_h_ref[...]
    x = x_ref[...].astype(jnp.float32)                                # (10, TM)
    x_mod = x * (scale + 1.0) + shift

    # conv1 split: concat(x', PE', LEchs) @ w1 ->
    #   w1[:10]^T @ x' + w1[10:44]^T @ PE' + per-batch bias1
    # (bias1 = lechs @ w1[44:] + b1, computed in the wrapper)
    h = (jnp.dot(w1x_ref[...], x_mod.astype(jnp.bfloat16),
                 preferred_element_type=jnp.float32)
         + jnp.dot(w1pe_ref[...], pe_bf, preferred_element_type=jnp.float32)
         + bias1_ref[...])
    h = _lrelu(h)                                                     # (128, TM) f32

    # one-pass BN partials (sum, sum of squares) over valid pixel columns only
    mask = _col_mask(tile_cols, hw_valid)
    hm = jnp.where(mask, h, 0.0)
    sum_ref[...] = jnp.sum(hm, axis=1, keepdims=True)
    sumsq_ref[...] = jnp.sum(hm * hm, axis=1, keepdims=True)
    h_ref[...] = h.astype(jnp.bfloat16)


# ----------------------------------------------------------------------------
# Middle stages (conv2, conv3): previous BN already folded into (w, b).
# ----------------------------------------------------------------------------
def mid_stage_kernel(h_in_ref, w_ref, b_ref,
                     h_ref, sum_ref, sumsq_ref,
                     *, tile_cols, hw_valid):
    h = jnp.dot(w_ref[...], h_in_ref[...],
                preferred_element_type=jnp.float32) + b_ref[...]
    h = _lrelu(h)
    mask = _col_mask(tile_cols, hw_valid)
    hm = jnp.where(mask, h, 0.0)
    sum_ref[...] = jnp.sum(hm, axis=1, keepdims=True)
    sumsq_ref[...] = jnp.sum(hm * hm, axis=1, keepdims=True)
    h_ref[...] = h.astype(jnp.bfloat16)


# ----------------------------------------------------------------------------
# Final stage (conv4): BN3 folded into (w, b); output is (2, TM), i.e.
# lane-dense (full-lane vst) and already channels-first.
# ----------------------------------------------------------------------------
def final_stage_kernel(h_in_ref, w_ref, b_ref, out_ref):
    out_ref[...] = jnp.dot(w_ref[...], h_in_ref[...],
                           preferred_element_type=jnp.float32) + b_ref[...]


_COMPILER_PARAMS = pltpu.CompilerParams(
    dimension_semantics=("parallel", "parallel"),
    vmem_limit_bytes=32 * 1024 * 1024)   # v5e scoped default is only 16 MiB


def _run_stage1(x_p, pe_p, spe, hpe, bias_s, bias_h, bias1,
                wls, wlh, w1x, w1pe, *, tm, hw_valid):
    B, _, HW_pad = x_p.shape
    T = HW_pad // tm
    kernel = functools.partial(stage1_kernel, tile_cols=tm, hw_valid=hw_valid)
    return pl.pallas_call(
        kernel,
        out_shape=(
            jax.ShapeDtypeStruct((B, 128, HW_pad), jnp.bfloat16),
            jax.ShapeDtypeStruct((B, T, 128, 1), jnp.float32),
            jax.ShapeDtypeStruct((B, T, 128, 1), jnp.float32),
        ),
        grid=(B, T),
        in_specs=[
            _pixel_spec(10, tm), _pixel_spec(34, tm),
            _batchvec_spec(34), _batchvec_spec(34),
            _batchvec_spec(10), _batchvec_spec(10), _batchvec_spec(128),
            _wspec(wls.shape), _wspec(wlh.shape),
            _wspec(w1x.shape), _wspec(w1pe.shape),
        ],
        out_specs=(_pixel_spec(128, tm), _stats_spec(128), _stats_spec(128)),
        compiler_params=_COMPILER_PARAMS,
    )(x_p, pe_p, spe, hpe, bias_s, bias_h, bias1, wls, wlh, w1x, w1pe)


def _run_mid(h_in, w, b, *, tm, hw_valid, cout):
    B, cin, HW_pad = h_in.shape
    T = HW_pad // tm
    kernel = functools.partial(mid_stage_kernel, tile_cols=tm, hw_valid=hw_valid)
    return pl.pallas_call(
        kernel,
        out_shape=(
            jax.ShapeDtypeStruct((B, cout, HW_pad), jnp.bfloat16),
            jax.ShapeDtypeStruct((B, T, cout, 1), jnp.float32),
            jax.ShapeDtypeStruct((B, T, cout, 1), jnp.float32),
        ),
        grid=(B, T),
        in_specs=[_pixel_spec(cin, tm), _wspec(w.shape), _wspec(b.shape)],
        out_specs=(_pixel_spec(cout, tm), _stats_spec(cout), _stats_spec(cout)),
        compiler_params=_COMPILER_PARAMS,
    )(h_in, w, b)


def _run_final(h_in, w, b, *, tm):
    B, cin, HW_pad = h_in.shape
    T = HW_pad // tm
    return pl.pallas_call(
        final_stage_kernel,
        out_shape=jax.ShapeDtypeStruct((B, 2, HW_pad), jnp.float32),
        grid=(B, T),
        in_specs=[_pixel_spec(cin, tm), _wspec(w.shape), _wspec(b.shape)],
        out_specs=_pixel_spec(2, tm),
        compiler_params=_COMPILER_PARAMS,
    )(h_in, w, b)


# ----------------------------------------------------------------------------
# Plain-JAX glue: SinusoidalPositionEmbeddings + per-batch layer MLPs (operate
# on (B, 32) only), BN-fold math, and parameter setup.
# ----------------------------------------------------------------------------
def sinusoidal_emb(layer, dim):
    # Exact port of the SinusoidalPositionEmbeddings module.
    half = dim // 2
    freq = jnp.exp(jnp.arange(half, dtype=jnp.float32)
                   * -(math.log(10000.0) / (half - 1)))
    ang = layer.astype(jnp.float32)[:, None] * freq[None, :]
    return jnp.concatenate([jnp.sin(ang), jnp.cos(ang)], axis=-1)


def mlp_forward(LE, p):
    w1, b1, w2, b2 = p
    h = sinusoidal_emb(LE, 32)
    h = h @ w1 + b1
    h = jax.nn.gelu(h, approximate=False)      # nn.GELU default = exact (erf)
    return h @ w2 + b2


def _bn_fold(sums, sumsqs, count, gamma, beta, w_next, b_next):
    """Fold training-mode BN (biased batch stats) into the next conv.

    # TODO(synk): one-pass E[x^2]-E[x]^2 in f32 can lose precision when
    # |mean| >> std; switch to per-tile-centered sumsq if tolerances tighten.
    """
    total = jnp.sum(sums, axis=(0, 1, 3))               # (C,)
    total_sq = jnp.sum(sumsqs, axis=(0, 1, 3))          # (C,)
    mean = total / count
    var = jnp.maximum(total_sq / count - mean * mean, 0.0)
    a = gamma * jax.lax.rsqrt(var + BN_EPS)             # BN(h) = h*a + c
    c = beta - mean * a
    w_f = a[:, None] * w_next                           # diag(a) @ W   (Cin, Cout)
    b_f = c @ w_next + b_next
    return w_f, b_f


def init_params(key):
    keys = iter(jax.random.split(key, 64))

    def lin(cin, cout):
        bound = 1.0 / math.sqrt(cin)
        w = jax.random.uniform(next(keys), (cin, cout), jnp.float32, -bound, bound)
        b = jax.random.uniform(next(keys), (cout,), jnp.float32, -bound, bound)
        return w, b

    p = {}
    p["mlp1"] = (*lin(32, 32), *lin(32, 32))       # layer_mlp   -> (B, 32)
    p["mlp2"] = (*lin(32, 32), *lin(32, 68))       # layer_mlp2  -> (B, 68)
    p["mlp3"] = (*lin(32, 32), *lin(32, 10))       # layer_mlp3  -> (B, 10)
    p["wl"], p["bl"] = lin(44, 20)                 # convLEPEforX (1x1)
    p["w1"], p["b1"] = lin(76, 128)                # conv1
    p["w2"], p["b2"] = lin(128, 64)                # conv2
    p["w3"], p["b3"] = lin(64, 32)                 # conv3
    p["w4"], p["b4"] = lin(32, 2)                  # conv4
    for name, c in (("1", 128), ("2", 64), ("3", 32)):   # BatchNorm affine
        p["g" + name] = jnp.ones((c,), jnp.float32)
        p["be" + name] = jnp.zeros((c,), jnp.float32)
    return p


def kspace_net_t1(params, x, PE, LE, *, tile_rows=4096):
    B, Cx, H, W = x.shape
    HW = H * W

    # ---- per-batch embeddings (tiny, plain JAX) ----
    lechs = mlp_forward(LE, params["mlp1"])        # (B, 32)
    lefor_pe = mlp_forward(LE, params["mlp2"])     # (B, 68)
    spe, hpe = lefor_pe[:, :34], lefor_pe[:, 34:]  # scale / shift for PE
    lex = mlp_forward(LE, params["mlp3"])          # (B, 10)

    # ---- split concat-matmuls: per-piece weights (transposed to channels-first
    #      (Cout, Cin) form, bf16) + per-batch bias column vectors ----
    # Concat order assumed: convLEPEforX input = [PE'(0:34), lex(34:44)];
    # conv1 input = [x'(0:10), PE'(10:44), lechs(44:76)].
    wl, bl = params["wl"], params["bl"]
    bias_l = lex @ wl[34:, :] + bl                 # (B, 20)  lex contribution
    bias_s, bias_h = bias_l[:, :10], bias_l[:, 10:]
    wls_t = wl[:34, :10].T.astype(jnp.bfloat16)    # (10, 34) scale branch
    wlh_t = wl[:34, 10:].T.astype(jnp.bfloat16)    # (10, 34) shift branch

    w1, b1 = params["w1"], params["b1"]
    bias1 = lechs @ w1[44:, :] + b1                # (B, 128) lechs contribution
    w1x_t = w1[:10, :].T.astype(jnp.bfloat16)      # (128, 10)
    w1pe_t = w1[10:44, :].T.astype(jnp.bfloat16)   # (128, 34)

    # ---- pixel layout: keep NCHW (channels-first).  Free reshape to
    # (B, C, HW); bf16 cast BEFORE the pad so the one remaining copy is half
    # size.  No transpose pass at all.
    # TODO(synk): with a producer that emits HW already padded to a tile
    # multiple, the convert+pad copy disappears entirely.
    n_tiles = pl.cdiv(HW, tile_rows)
    tm = _round_up(pl.cdiv(HW, n_tiles), 128)
    HW_pad = n_tiles * tm

    def to_pixels(a):
        a = a.astype(jnp.bfloat16).reshape(B, a.shape[1], HW)
        if HW_pad != HW:
            a = jnp.pad(a, ((0, 0), (0, 0), (0, HW_pad - HW)))
        return a

    x_p = to_pixels(x)                             # (B, 10, HW_pad) bf16
    pe_p = to_pixels(PE)                           # (B, 34, HW_pad) bf16

    count = float(B * HW)                          # BN stats over all real pixels

    # ---- stage 1: FiLM + conv1 + LeakyReLU (+ BN1 partial stats) ----
    h1, s1, q1 = _run_stage1(
        x_p, pe_p, spe[:, :, None], hpe[:, :, None],
        bias_s[:, :, None], bias_h[:, :, None], bias1[:, :, None],
        wls_t, wlh_t, w1x_t, w1pe_t, tm=tm, hw_valid=HW)

    # ---- BN1 folded into conv2 ----
    w2f, b2f = _bn_fold(s1, q1, count, params["g1"], params["be1"],
                        params["w2"], params["b2"])
    h2, s2, q2 = _run_mid(h1, w2f.T.astype(jnp.bfloat16), b2f[:, None],
                          tm=tm, hw_valid=HW, cout=64)

    # ---- BN2 folded into conv3 ----
    w3f, b3f = _bn_fold(s2, q2, count, params["g2"], params["be2"],
                        params["w3"], params["b3"])
    h3, s3, q3 = _run_mid(h2, w3f.T.astype(jnp.bfloat16), b3f[:, None],
                          tm=tm, hw_valid=HW, cout=32)

    # ---- BN3 folded into conv4; output already channels-first & lane-dense ----
    w4f, b4f = _bn_fold(s3, q3, count, params["g3"], params["be3"],
                        params["w4"], params["b4"])
    out = _run_final(h3, w4f.T.astype(jnp.bfloat16), b4f[:, None], tm=tm)

    # (B, 2, HW_pad) -> (B, 2, H, W): drop pad, no transpose needed.
    return out[:, :, :HW].reshape(B, 2, H, W)


if __name__ == "__main__":
    key = jax.random.PRNGKey(0)
    kp, kx, kpe, kle = jax.random.split(key, 4)

    params = init_params(kp)

    B, H, W = 2, 16, 16
    x = jax.random.normal(kx, (B, 10, H, W), jnp.float32)
    PE = jax.random.normal(kpe, (B, 34, H, W), jnp.float32)
    LE = jax.random.uniform(kle, (B,), jnp.float32, 0.0, 10.0)

    out = kspace_net_t1(params, x, PE, LE)
    jax.block_until_ready(out)
    assert out.shape == (B, 2, H, W), out.shape
    assert out.dtype == jnp.float32
    print("KERNEL_OK")
</pallas_src>

<mosaic_0001>
module attributes {stable_mosaic.version = 11 : i64} {
  func.func @stage1_kernel(%arg0: i32, %arg1: i32, %arg2: memref<1x10x256xbf16, #tpu.memory_space<vmem>>, %arg3: memref<1x34x256xbf16, #tpu.memory_space<vmem>>, %arg4: memref<1x34x1xf32, #tpu.memory_space<vmem>>, %arg5: memref<1x34x1xf32, #tpu.memory_space<vmem>>, %arg6: memref<1x10x1xf32, #tpu.memory_space<vmem>>, %arg7: memref<1x10x1xf32, #tpu.memory_space<vmem>>, %arg8: memref<1x128x1xf32, #tpu.memory_space<vmem>>, %arg9: memref<10x34xbf16, #tpu.memory_space<vmem>>, %arg10: memref<10x34xbf16, #tpu.memory_space<vmem>>, %arg11: memref<128x10xbf16, #tpu.memory_space<vmem>>, %arg12: memref<128x34xbf16, #tpu.memory_space<vmem>>, %arg13: memref<1x128x256xbf16, #tpu.memory_space<vmem>>, %arg14: memref<1x1x128x1xf32, #tpu.memory_space<vmem>>, %arg15: memref<1x1x128x1xf32, #tpu.memory_space<vmem>>) attributes {dimension_semantics = [#tpu.dimension_semantics<parallel>, #tpu.dimension_semantics<parallel>], iteration_bounds = array<i64: 2, 1>, scalar_prefetch = 0 : i64, scratch_operands = 0 : i64, tpu.core_type = #tpu.core_type<tc>, window_params = [{transform_indices = @transform_0, window_bounds = array<i64: 1, 10, 256>}, {transform_indices = @transform_1, window_bounds = array<i64: 1, 34, 256>}, {transform_indices = @transform_2, window_bounds = array<i64: 1, 34, 1>}, {transform_indices = @transform_3, window_bounds = array<i64: 1, 34, 1>}, {transform_indices = @transform_4, window_bounds = array<i64: 1, 10, 1>}, {transform_indices = @transform_5, window_bounds = array<i64: 1, 10, 1>}, {transform_indices = @transform_6, window_bounds = array<i64: 1, 128, 1>}, {pipeline_mode = #tpu.pipeline_mode<synchronous>, transform_indices = @transform_7, window_bounds = array<i64: 10, 34>}, {pipeline_mode = #tpu.pipeline_mode<synchronous>, transform_indices = @transform_8, window_bounds = array<i64: 10, 34>}, {pipeline_mode = #tpu.pipeline_mode<synchronous>, transform_indices = @transform_9, window_bounds = array<i64: 128, 10>}, {pipeline_mode = #tpu.pipeline_mode<synchronous>, transform_indices = @transform_10, window_bounds = array<i64: 128, 34>}, {transform_indices = @transform_11, window_bounds = array<i64: 1, 128, 256>}, {transform_indices = @transform_12, window_bounds = array<i64: 1, 1, 128, 1>}, {transform_indices = @transform_13, window_bounds = array<i64: 1, 1, 128, 1>}]} {
    %c0 = arith.constant 0 : index
    %c0_0 = arith.constant 0 : index
    %c0_1 = arith.constant 0 : index
    %0 = vector.load %arg3[%c0, %c0_0, %c0_1] : memref<1x34x256xbf16, #tpu.memory_space<vmem>>, vector<1x34x256xbf16>
    %1 = vector.shape_cast %0 : vector<1x34x256xbf16> to vector<34x256xbf16>
    %2 = arith.extf %1 : vector<34x256xbf16> to vector<34x256xf32>
    %c0_2 = arith.constant 0 : index
    %c0_3 = arith.constant 0 : index
    %c0_4 = arith.constant 0 : index
    %3 = vector.load %arg4[%c0_2, %c0_3, %c0_4] : memref<1x34x1xf32, #tpu.memory_space<vmem>>, vector<1x34x1xf32>
    %4 = vector.shape_cast %3 : vector<1x34x1xf32> to vector<34x1xf32>
    %cst = arith.constant 1.000000e+00 : f32
    %5 = vector.broadcast %cst : f32 to vector<34x1xf32>
    %6 = arith.addf %4, %5 : vector<34x1xf32>
    %7 = vector.broadcast %6 : vector<34x1xf32> to vector<34x256xf32>
    %8 = arith.mulf %2, %7 : vector<34x256xf32>
    %c0_5 = arith.constant 0 : index
    %c0_6 = arith.constant 0 : index
    %c0_7 = arith.constant 0 : index
    %9 = vector.load %arg5[%c0_5, %c0_6, %c0_7] : memref<1x34x1xf32, #tpu.memory_space<vmem>>, vector<1x34x1xf32>
    %10 = vector.shape_cast %9 : vector<1x34x1xf32> to vector<34x1xf32>
    %11 = vector.broadcast %10 : vector<34x1xf32> to vector<34x256xf32>
    %12 = arith.addf %8, %11 : vector<34x256xf32>
    %13 = arith.truncf %12 : vector<34x256xf32> to vector<34x256xbf16>
    %c0_8 = arith.constant 0 : index
    %c0_9 = arith.constant 0 : index
    %14 = vector.load %arg9[%c0_8, %c0_9] : memref<10x34xbf16, #tpu.memory_space<vmem>>, vector<10x34xbf16>
    %cst_10 = arith.constant dense<0.000000e+00> : vector<10x256xf32>
    %15 = tpu.matmul %14, %13, %cst_10 {dimension_numbers = #tpu.dot_dimension_numbers<[1], [0], [0], [1], [0, 0, 1, 1], [], []>} : vector<10x34xbf16>, vector<34x256xbf16>, vector<10x256xf32> -> vector<10x256xf32>
    %c0_11 = arith.constant 0 : index
    %c0_12 = arith.constant 0 : index
    %c0_13 = arith.constant 0 : index
    %16 = vector.load %arg6[%c0_11, %c0_12, %c0_13] : memref<1x10x1xf32, #tpu.memory_space<vmem>>, vector<1x10x1xf32>
    %17 = vector.shape_cast %16 : vector<1x10x1xf32> to vector<10x1xf32>
    %18 = vector.broadcast %17 : vector<10x1xf32> to vector<10x256xf32>
    %19 = arith.addf %15, %18 : vector<10x256xf32>
    %c0_14 = arith.constant 0 : index
    %c0_15 = arith.constant 0 : index
    %20 = vector.load %arg10[%c0_14, %c0_15] : memref<10x34xbf16, #tpu.memory_space<vmem>>, vector<10x34xbf16>
    %cst_16 = arith.constant dense<0.000000e+00> : vector<10x256xf32>
    %21 = tpu.matmul %20, %13, %cst_16 {dimension_numbers = #tpu.dot_dimension_numbers<[1], [0], [0], [1], [0, 0, 1, 1], [], []>} : vector<10x34xbf16>, vector<34x256xbf16>, vector<10x256xf32> -> vector<10x256xf32>
    %c0_17 = arith.constant 0 : index
    %c0_18 = arith.constant 0 : index
    %c0_19 = arith.constant 0 : index
    %22 = vector.load %arg7[%c0_17, %c0_18, %c0_19] : memref<1x10x1xf32, #tpu.memory_space<vmem>>, vector<1x10x1xf32>
    %23 = vector.shape_cast %22 : vector<1x10x1xf32> to vector<10x1xf32>
    %24 = vector.broadcast %23 : vector<10x1xf32> to vector<10x256xf32>
    %25 = arith.addf %21, %24 : vector<10x256xf32>
    %c0_20 = arith.constant 0 : index
    %c0_21 = arith.constant 0 : index
    %c0_22 = arith.constant 0 : index
    %26 = vector.load %arg2[%c0_20, %c0_21, %c0_22] : memref<1x10x256xbf16, #tpu.memory_space<vmem>>, vector<1x10x256xbf16>
    %27 = vector.shape_cast %26 : vector<1x10x256xbf16> to vector<10x256xbf16>
    %28 = arith.extf %27 : vector<10x256xbf16> to vector<10x256xf32>
    %cst_23 = arith.constant 1.000000e+00 : f32
    %29 = vector.broadcast %cst_23 : f32 to vector<10x256xf32>
    %30 = arith.addf %19, %29 : vector<10x256xf32>
    %31 = arith.mulf %28, %30 : vector<10x256xf32>
    %32 = arith.addf %31, %25 : vector<10x256xf32>
    %c0_24 = arith.constant 0 : index
    %c0_25 = arith.constant 0 : index
    %33 = vector.load %arg11[%c0_24, %c0_25] : memref<128x10xbf16, #tpu.memory_space<vmem>>, vector<128x10xbf16>
    %34 = arith.truncf %32 : vector<10x256xf32> to vector<10x256xbf16>
    %cst_26 = arith.constant dense<0.000000e+00> : vector<128x256xf32>
    %35 = tpu.matmul %33, %34, %cst_26 {dimension_numbers = #tpu.dot_dimension_numbers<[1], [0], [0], [1], [0, 0, 1, 1], [], []>} : vector<128x10xbf16>, vector<10x256xbf16>, vector<128x256xf32> -> vector<128x256xf32>
    %c0_27 = arith.constant 0 : index
    %c0_28 = arith.constant 0 : index
    %36 = vector.load %arg12[%c0_27, %c0_28] : memref<128x34xbf16, #tpu.memory_space<vmem>>, vector<128x34xbf16>
    %cst_29 = arith.constant dense<0.000000e+00> : vector<128x256xf32>
    %37 = tpu.matmul %36, %13, %cst_29 {dimension_numbers = #tpu.dot_dimension_numbers<[1], [0], [0], [1], [0, 0, 1, 1], [], []>} : vector<128x34xbf16>, vector<34x256xbf16>, vector<128x256xf32> -> vector<128x256xf32>
    %38 = arith.addf %35, %37 : vector<128x256xf32>
    %c0_30 = arith.constant 0 : index
    %c0_31 = arith.constant 0 : index
    %c0_32 = arith.constant 0 : index
    %39 = vector.load %arg8[%c0_30, %c0_31, %c0_32] : memref<1x128x1xf32, #tpu.memory_space<vmem>>, vector<1x128x1xf32>
    %40 = vector.shape_cast %39 : vector<1x128x1xf32> to vector<128x1xf32>
    %41 = vector.broadcast %40 : vector<128x1xf32> to vector<128x256xf32>
    %42 = arith.addf %38, %41 : vector<128x256xf32>
    %cst_33 = arith.constant 2.000000e-01 : f32
    %43 = vector.broadcast %cst_33 : f32 to vector<128x256xf32>
    %44 = arith.mulf %43, %42 : vector<128x256xf32>
    %45 = arith.maximumf %42, %44 : vector<128x256xf32>
    %c256_i32 = arith.constant 256 : i32
    %46 = arith.muli %arg1, %c256_i32 : i32
    %47 = tpu.iota {dimensions = array<i32: 1>} : vector<1x256xi32>
    %48 = vector.broadcast %46 : i32 to vector<1x256xi32>
    %49 = arith.addi %48, %47 : vector<1x256xi32>
    %c256_i32_34 = arith.constant 256 : i32
    %50 = vector.broadcast %c256_i32_34 : i32 to vector<1x256xi32>
    %51 = arith.cmpi slt, %49, %50 : vector<1x256xi32>
    %cst_35 = arith.constant 0.000000e+00 : f32
    %52 = vector.shape_cast %51 : vector<1x256xi1> to vector<1x256xi1>
    %53 = vector.broadcast %52 : vector<1x256xi1> to vector<128x256xi1>
    %54 = vector.broadcast %cst_35 : f32 to vector<128x256xf32>
    %55 = arith.select %53, %45, %54 : vector<128x256xi1>, vector<128x256xf32>
    %cst_36 = arith.constant dense<0.000000e+00> : vector<128xf32>
    %56 = vector.multi_reduction <add>, %55, %cst_36 [1] : vector<128x256xf32> to vector<128xf32>
    %57 = vector.shape_cast %56 : vector<128xf32> to vector<128x1xf32>
    %c0_37 = arith.constant 0 : index
    %c0_38 = arith.constant 0 : index
    %c0_39 = arith.constant 0 : index
    %c0_40 = arith.constant 0 : index
    %58 = vector.load %arg14[%c0_37, %c0_38, %c0_39, %c0_40] : memref<1x1x128x1xf32, #tpu.memory_space<vmem>>, vector<1x1x128x1xf32>
    %59 = vector.shape_cast %58 : vector<1x1x128x1xf32> to vector<128x1xf32>
    %60 = vector.shape_cast %57 : vector<128x1xf32> to vector<1x1x128x1xf32>
    tpu.vector_store %arg14[%c0_37, %c0_38, %c0_39, %c0_40], %60 {strides = array<i32>} : memref<1x1x128x1xf32, #tpu.memory_space<vmem>>, vector<1x1x128x1xf32>,
    %61 = arith.mulf %55, %55 : vector<128x256xf32>
    %cst_41 = arith.constant dense<0.000000e+00> : vector<128xf32>
    %62 = vector.multi_reduction <add>, %61, %cst_41 [1] : vector<128x256xf32> to vector<128xf32>
    %63 = vector.shape_cast %62 : vector<128xf32> to vector<128x1xf32>
    %c0_42 = arith.constant 0 : index
    %c0_43 = arith.constant 0 : index
    %c0_44 = arith.constant 0 : index
    %c0_45 = arith.constant 0 : index
    %64 = vector.load %arg15[%c0_42, %c0_43, %c0_44, %c0_45] : memref<1x1x128x1xf32, #tpu.memory_space<vmem>>, vector<1x1x128x1xf32>
    %65 = vector.shape_cast %64 : vector<1x1x128x1xf32> to vector<128x1xf32>
    %66 = vector.shape_cast %63 : vector<128x1xf32> to vector<1x1x128x1xf32>
    tpu.vector_store %arg15[%c0_42, %c0_43, %c0_44, %c0_45], %66 {strides = array<i32>} : memref<1x1x128x1xf32, #tpu.memory_space<vmem>>, vector<1x1x128x1xf32>,
    %67 = arith.truncf %45 : vector<128x256xf32> to vector<128x256xbf16>
    %c0_46 = arith.constant 0 : index
    %c0_47 = arith.constant 0 : index
    %c0_48 = arith.constant 0 : index
    %68 = vector.load %arg13[%c0_46, %c0_47, %c0_48] : memref<1x128x256xbf16, #tpu.memory_space<vmem>>, vector<1x128x256xbf16>
    %69 = vector.shape_cast %68 : vector<1x128x256xbf16> to vector<128x256xbf16>
    %70 = vector.shape_cast %67 : vector<128x256xbf16> to vector<1x128x256xbf16>
    tpu.vector_store %arg13[%c0_46, %c0_47, %c0_48], %70 {strides = array<i32>} : memref<1x128x256xbf16, #tpu.memory_space<vmem>>, vector<1x128x256xbf16>,
    return
  }
  func.func @transform_0(%arg0: i32, %arg1: i32) -> (i32, i32, i32) {
    %c0_i32 = arith.constant 0 : i32
    %c0_i32_0 = arith.constant 0 : i32
    return %arg0, %c0_i32, %arg1 : i32, i32, i32
  }
  func.func @transform_1(%arg0: i32, %arg1: i32) -> (i32, i32, i32) {
    %c0_i32 = arith.constant 0 : i32
    %c0_i32_0 = arith.constant 0 : i32
    return %arg0, %c0_i32, %arg1 : i32, i32, i32
  }
  func.func @transform_2(%arg0: i32, %arg1: i32) -> (i32, i32, i32) {
    %c0_i32 = arith.constant 0 : i32
    %c0_i32_0 = arith.constant 0 : i32
    %c0_i32_1 = arith.constant 0 : i32
    return %arg0, %c0_i32, %c0_i32_0 : i32, i32, i32
  }
  func.func @transform_3(%arg0: i32, %arg1: i32) -> (i32, i32, i32) {
    %c0_i32 = arith.constant 0 : i32
    %c0_i32_0 = arith.constant 0 : i32
    %c0_i32_1 = arith.constant 0 : i32
    return %arg0, %c0_i32, %c0_i32_0 : i32, i32, i32
  }
  func.func @transform_4(%arg0: i32, %arg1: i32) -> (i32, i32, i32) {
    %c0_i32 = arith.constant 0 : i32
    %c0_i32_0 = arith.constant 0 : i32
    %c0_i32_1 = arith.constant 0 : i32
    return %arg0, %c0_i32, %c0_i32_0 : i32, i32, i32
  }
  func.func @transform_5(%arg0: i32, %arg1: i32) -> (i32, i32, i32) {
    %c0_i32 = arith.constant 0 : i32
    %c0_i32_0 = arith.constant 0 : i32
    %c0_i32_1 = arith.constant 0 : i32
    return %arg0, %c0_i32, %c0_i32_0 : i32, i32, i32
  }
  func.func @transform_6(%arg0: i32, %arg1: i32) -> (i32, i32, i32) {
    %c0_i32 = arith.constant 0 : i32
    %c0_i32_0 = arith.constant 0 : i32
    %c0_i32_1 = arith.constant 0 : i32
    return %arg0, %c0_i32, %c0_i32_0 : i32, i32, i32
  }
  func.func @transform_7(%arg0: i32, %arg1: i32) -> (i32, i32) {
    %c0_i32 = arith.constant 0 : i32
    %c0_i32_0 = arith.constant 0 : i32
    %c0_i32_1 = arith.constant 0 : i32
    return %c0_i32, %c0_i32_0 : i32, i32
  }
  func.func @transform_8(%arg0: i32, %arg1: i32) -> (i32, i32) {
    %c0_i32 = arith.constant 0 : i32
    %c0_i32_0 = arith.constant 0 : i32
    %c0_i32_1 = arith.constant 0 : i32
    return %c0_i32, %c0_i32_0 : i32, i32
  }
  func.func @transform_9(%arg0: i32, %arg1: i32) -> (i32, i32) {
    %c0_i32 = arith.constant 0 : i32
    %c0_i32_0 = arith.constant 0 : i32
    %c0_i32_1 = arith.constant 0 : i32
    return %c0_i32, %c0_i32_0 : i32, i32
  }
  func.func @transform_10(%arg0: i32, %arg1: i32) -> (i32, i32) {
    %c0_i32 = arith.constant 0 : i32
    %c0_i32_0 = arith.constant 0 : i32
    %c0_i32_1 = arith.constant 0 : i32
    return %c0_i32, %c0_i32_0 : i32, i32
  }
  func.func @transform_11(%arg0: i32, %arg1: i32) -> (i32, i32, i32) {
    %c0_i32 = arith.constant 0 : i32
    %c0_i32_0 = arith.constant 0 : i32
    return %arg0, %c0_i32, %arg1 : i32, i32, i32
  }
  func.func @transform_12(%arg0: i32, %arg1: i32) -> (i32, i32, i32, i32) {
    %c0_i32 = arith.constant 0 : i32
    %c0_i32_0 = arith.constant 0 : i32
    %c0_i32_1 = arith.constant 0 : i32
    return %arg0, %arg1, %c0_i32, %c0_i32_0 : i32, i32, i32, i32
  }
  func.func @transform_13(%arg0: i32, %arg1: i32) -> (i32, i32, i32, i32) {
    %c0_i32 = arith.constant 0 : i32
    %c0_i32_0 = arith.constant 0 : i32
    %c0_i32_1 = arith.constant 0 : i32
    return %arg0, %arg1, %c0_i32, %c0_i32_0 : i32, i32, i32, i32
  }
}

</mosaic_0001>

<llo_original>
// kernel: tpu_custom_call.1
$region0: #{tpu_custom_call.1}
  #allocation0 [shape = 'u32[]', space=smem, size = 0x4, offset = 0x4, fixed_abs, tag = 'smem constant byte address 0x4 - core index']
  #allocation1 [shape = 'u32[144,128]{1,0:T(1,128)}', space=vmem, size = 0x12000, scoped, tag = 'internal scratch']
  %s0 = inlined_call_operand.vmem [shape: bf16[2,10,256], index: 0, kind: input, shape index: {}]
  %s1 = inlined_call_operand.vmem [shape: bf16[2,34,256], index: 1, kind: input, shape index: {}]
  %s2 = inlined_call_operand.vmem [shape: f32[2,34,1], index: 2, kind: input, shape index: {}]
  %s3 = inlined_call_operand.vmem [shape: f32[2,34,1], index: 3, kind: input, shape index: {}]
  %s4 = inlined_call_operand.vmem [shape: f32[2,10,1], index: 4, kind: input, shape index: {}]
  %s5 = inlined_call_operand.vmem [shape: f32[2,10,1], index: 5, kind: input, shape index: {}]
  %s6 = inlined_call_operand.vmem [shape: f32[2,128,1], index: 6, kind: input, shape index: {}]
  %s7 = inlined_call_operand.vmem [shape: bf16[10,34], index: 7, kind: input, shape index: {}]
  %s8 = inlined_call_operand.vmem [shape: bf16[10,34], index: 8, kind: input, shape index: {}]
  %s9 = inlined_call_operand.vmem [shape: bf16[128,10], index: 9, kind: input, shape index: {}]
  %s10 = inlined_call_operand.vmem [shape: bf16[128,34], index: 10, kind: input, shape index: {}]
  %s11 = inlined_call_operand.hbm [shape: bf16[2,128,256], index: 11, kind: output, shape index: {0}]
  %s12 = inlined_call_operand.vmem [shape: f32[2,1,128,1], index: 12, kind: output, shape index: {1}]
  %s13 = inlined_call_operand.vmem [shape: f32[2,1,128,1], index: 13, kind: output, shape index: {2}]
  %14 = xla_tuple %s11, %s12, %s13
  %s15 = sld [smem:[#allocation0]]
  $region93: #{tpu_custom_call.1} parent=0
    _
  %s17 = ssub.s32 1, %s15
  %s18 = scalar_select 0, %s17, %s15
  $region1: #{tpu_custom_call.1} parent=0
    #allocation2 [shape = 'u8[131072]{0}', space=vmem, size = 0x20000, scoped, tag = 'output window, operand 0']
    #allocation3 [shape = 's32[2]{0}', space=sflag, size = 0x8, scoped, tag = 'scoped memory for tpu_custom_call.1']
    %19 = vsyncpa [#allocation3], 0
    %s20 = scalar_lea.sflag [#allocation3], 1
    %21 = vsyncpa %s20, 0
    loop: start=0, step=1, limit=4
    $region2: #{tpu_custom_call.1} parent=1 // loop_pre_header
      _
    $region3: #{tpu_custom_call.1} parent=1 // loop_header
      %s23 = sphi 0, %s27
      %p24 = scmp.ge.s32.totalorder %s23, 4
      %s30 = sphi 0, %s42
      %s31 = sphi 0, %s38
      %s32 = sphi 0, %s30
      %s33 = sphi 0, %s31
      %s34 = sphi 0, %s32
      %s35 = sphi 0, %s33
      %s47 = sphi 0, %s49
      %s50 = sphi 0, %s47
      %s51 = sphi 0, %s50
      %s67 = sphi 0, %s51
      %s75 = sphi 0, %s77
      %s78 = sphi 0, %s75
      %s79 = sphi 0, %s78
      %s95 = sphi 0, %s79
      %s101 = sphi 0, %s103
      %s104 = sphi 0, %s101
      %s105 = sphi 0, %s104
      %s121 = sphi 0, %s105
      %s127 = sphi 0, %s129
      %s130 = sphi 0, %s127
      %s131 = sphi 0, %s130
      %s147 = sphi 0, %s131
      %s153 = sphi 0, %s155
      %s156 = sphi 0, %s153
      %s157 = sphi 0, %s156
      %s173 = sphi 0, %s157
      %s179 = sphi 0, %s181
      %s182 = sphi 0, %s179
      %s183 = sphi 0, %s182
      %s199 = sphi 0, %s183
      %s205 = sphi 0, %s207
      %s208 = sphi 0, %s205
      %s209 = sphi 0, %s208
      %s225 = sphi 0, %s209
      %s229 = sphi 0, %s229
      %s231 = sphi 0, %s229
      %s232 = sphi 0, %s231
      %s246 = sphi 0, %s232
      %s250 = sphi 0, %s250
      %s252 = sphi 0, %s250
      %s253 = sphi 0, %s252
      %s267 = sphi 0, %s253
      %s271 = sphi 0, %s271
      %s273 = sphi 0, %s271
      %s274 = sphi 0, %s273
      %s288 = sphi 0, %s274
      %s292 = sphi 0, %s292
      %s294 = sphi 0, %s292
      %s295 = sphi 0, %s294
      %s309 = sphi 0, %s295
      %s317 = sphi 0, %s319
      %s320 = sphi 0, %s317
      %s321 = sphi 0, %s320
      %s337 = sphi 0, %s321
      %s345 = sphi 0, %s347
      %s348 = sphi 0, %s345
      %s349 = sphi 0, %s348
      %s365 = sphi 0, %s349
      %s373 = sphi 0, %s375
      %s376 = sphi 0, %s373
      %s377 = sphi 0, %s376
      %s393 = sphi 0, %s377
    $region4: #{tpu_custom_call.1} parent=1 // loop_header_branch
      %26 = sbr.rel (%p24) target = $region8
    $region5: #{tpu_custom_call.1} parent=1 // loop_body
      %s28 = ssub.s32 %s23, 1
      %s29 = ssub.s32 %s23, 2
      %s36 = sadd.s32 1, %s31
      %p37 = scmp.ge.s32.totalorder %s36, 1
      %s38 = scalar_select %p37, 0, %s36
      %s39 = sadd.s32 1, %s30
      %s40 = scalar_select %p37, %s39, %s30
      %p41 = scmp.ge.s32.totalorder %s40, 2
      %s42 = scalar_select %p41, 0, %s40
      %s43 = ssub.s32 %s30, %s42
      %s44 = ssub.s32 %s31, %s38
      %s45 = sor.u32 %s43, %s44
      %p46 = scmp.eq.s32.totalorder %s45, 0
      %s48 = sadd.s32 %s47, 1
      %s49 = scalar_select %p46, %s47, %s48
      %p52 = pneg %p46
      %p53 = scmp.eq.s32.totalorder %s23, 1
      %p54 = por %p52, %p53
      %p55 = scmp.ne.s32.totalorder %s47, %s50
      %p56 = scmp.eq.s32.totalorder %s23, 0
      %p57 = por %p55, %p56
      %p58 = scmp.ne.s32.totalorder %s47, %s50
      %p59 = scmp.eq.s32.totalorder %s28, 1
      %p60 = por %p58, %p59
      %p61 = scmp.ne.s32.totalorder %s50, %s51
      %p62 = scmp.eq.s32.totalorder %s28, 0
      %p63 = por %p61, %p62
      %p64 = scmp.ne.s32.totalorder %s50, %s51
      %p65 = scmp.eq.s32.totalorder %s29, 1
      %p66 = por %p64, %p65
      %p68 = scmp.ne.s32.totalorder %s51, %s67
      %p69 = scmp.eq.s32.totalorder %s29, 0
      %p70 = por %p68, %p69
      %s71 = ssub.s32 %s30, %s42
      %s72 = ssub.s32 %s31, %s38
      %s73 = sor.u32 %s71, %s72
      %p74 = scmp.eq.s32.totalorder %s73, 0
      %s76 = sadd.s32 %s75, 1
      %s77 = scalar_select %p74, %s75, %s76
      %p80 = pneg %p74
      %p81 = scmp.eq.s32.totalorder %s23, 1
      %p82 = por %p80, %p81
      %p83 = scmp.ne.s32.totalorder %s75, %s78
      %p84 = scmp.eq.s32.totalorder %s23, 0
      %p85 = por %p83, %p84
      %p86 = scmp.ne.s32.totalorder %s75, %s78
      %p87 = scmp.eq.s32.totalorder %s28, 1
      %p88 = por %p86, %p87
      %p89 = scmp.ne.s32.totalorder %s78, %s79
      %p90 = scmp.eq.s32.totalorder %s28, 0
      %p91 = por %p89, %p90
      %p92 = scmp.ne.s32.totalorder %s78, %s79
      %p93 = scmp.eq.s32.totalorder %s29, 1
      %p94 = por %p92, %p93
      %p96 = scmp.ne.s32.totalorder %s79, %s95
      %p97 = scmp.eq.s32.totalorder %s29, 0
      %p98 = por %p96, %p97
      %s99 = ssub.s32 %s30, %s42
      %p100 = scmp.eq.s32.totalorder %s99, 0
      %s102 = sadd.s32 %s101, 1
      %s103 = scalar_select %p100, %s101, %s102
      %p106 = pneg %p100
      %p107 = scmp.eq.s32.totalorder %s23, 1
      %p108 = por %p106, %p107
      %p109 = scmp.ne.s32.totalorder %s101, %s104
      %p110 = scmp.eq.s32.totalorder %s23, 0
      %p111 = por %p109, %p110
      %p112 = scmp.ne.s32.totalorder %s101, %s104
      %p113 = scmp.eq.s32.totalorder %s28, 1
      %p114 = por %p112, %p113
      %p115 = scmp.ne.s32.totalorder %s104, %s105
      %p116 = scmp.eq.s32.totalorder %s28, 0
      %p117 = por %p115, %p116
      %p118 = scmp.ne.s32.totalorder %s104, %s105
      %p119 = scmp.eq.s32.totalorder %s29, 1
      %p120 = por %p118, %p119
      %p122 = scmp.ne.s32.totalorder %s105, %s121
      %p123 = scmp.eq.s32.totalorder %s29, 0
      %p124 = por %p122, %p123
      %s125 = ssub.s32 %s30, %s42
      %p126 = scmp.eq.s32.totalorder %s125, 0
      %s128 = sadd.s32 %s127, 1
      %s129 = scalar_select %p126, %s127, %s128
      %p132 = pneg %p126
      %p133 = scmp.eq.s32.totalorder %s23, 1
      %p134 = por %p132, %p133
      %p135 = scmp.ne.s32.totalorder %s127, %s130
      %p136 = scmp.eq.s32.totalorder %s23, 0
      %p137 = por %p135, %p136
      %p138 = scmp.ne.s32.totalorder %s127, %s130
      %p139 = scmp.eq.s32.totalorder %s28, 1
      %p140 = por %p138, %p139
      %p141 = scmp.ne.s32.totalorder %s130, %s131
      %p142 = scmp.eq.s32.totalorder %s28, 0
      %p143 = por %p141, %p142
      %p144 = scmp.ne.s32.totalorder %s130, %s131
      %p145 = scmp.eq.s32.totalorder %s29, 1
      %p146 = por %p144, %p145
      %p148 = scmp.ne.s32.totalorder %s131, %s147
      %p149 = scmp.eq.s32.totalorder %s29, 0
      %p150 = por %p148, %p149
      %s151 = ssub.s32 %s30, %s42
      %p152 = scmp.eq.s32.totalorder %s151, 0
      %s154 = sadd.s32 %s153, 1
      %s155 = scalar_select %p152, %s153, %s154
      %p158 = pneg %p152
      %p159 = scmp.eq.s32.totalorder %s23, 1
      %p160 = por %p158, %p159
      %p161 = scmp.ne.s32.totalorder %s153, %s156
      %p162 = scmp.eq.s32.totalorder %s23, 0
      %p163 = por %p161, %p162
      %p164 = scmp.ne.s32.totalorder %s153, %s156
      %p165 = scmp.eq.s32.totalorder %s28, 1
      %p166 = por %p164, %p165
      %p167 = scmp.ne.s32.totalorder %s156, %s157
      %p168 = scmp.eq.s32.totalorder %s28, 0
      %p169 = por %p167, %p168
      %p170 = scmp.ne.s32.totalorder %s156, %s157
      %p171 = scmp.eq.s32.totalorder %s29, 1
      %p172 = por %p170, %p171
      %p174 = scmp.ne.s32.totalorder %s157, %s173
      %p175 = scmp.eq.s32.totalorder %s29, 0
      %p176 = por %p174, %p175
      %s177 = ssub.s32 %s30, %s42
      %p178 = scmp.eq.s32.totalorder %s177, 0
      %s180 = sadd.s32 %s179, 1
      %s181 = scalar_select %p178, %s179, %s180
      %p184 = pneg %p178
      %p185 = scmp.eq.s32.totalorder %s23, 1
      %p186 = por %p184, %p185
      %p187 = scmp.ne.s32.totalorder %s179, %s182
      %p188 = scmp.eq.s32.totalorder %s23, 0
      %p189 = por %p187, %p188
      %p190 = scmp.ne.s32.totalorder %s179, %s182
      %p191 = scmp.eq.s32.totalorder %s28, 1
      %p192 = por %p190, %p191
      %p193 = scmp.ne.s32.totalorder %s182, %s183
      %p194 = scmp.eq.s32.totalorder %s28, 0
      %p195 = por %p193, %p194
      %p196 = scmp.ne.s32.totalorder %s182, %s183
      %p197 = scmp.eq.s32.totalorder %s29, 1
      %p198 = por %p196, %p197
      %p200 = scmp.ne.s32.totalorder %s183, %s199
      %p201 = scmp.eq.s32.totalorder %s29, 0
      %p202 = por %p200, %p201
      %s203 = ssub.s32 %s30, %s42
      %p204 = scmp.eq.s32.totalorder %s203, 0
      %s206 = sadd.s32 %s205, 1
      %s207 = scalar_select %p204, %s205, %s206
      %p210 = pneg %p204
      %p211 = scmp.eq.s32.totalorder %s23, 1
      %p212 = por %p210, %p211
      %p213 = scmp.ne.s32.totalorder %s205, %s208
      %p214 = scmp.eq.s32.totalorder %s23, 0
      %p215 = por %p213, %p214
      %p216 = scmp.ne.s32.totalorder %s205, %s208
      %p217 = scmp.eq.s32.totalorder %s28, 1
      %p218 = por %p216, %p217
      %p219 = scmp.ne.s32.totalorder %s208, %s209
      %p220 = scmp.eq.s32.totalorder %s28, 0
      %p221 = por %p219, %p220
      %p222 = scmp.ne.s32.totalorder %s208, %s209
      %p223 = scmp.eq.s32.totalorder %s29, 1
      %p224 = por %p222, %p223
      %p226 = scmp.ne.s32.totalorder %s209, %s225
      %p227 = scmp.eq.s32.totalorder %s29, 0
      %p228 = por %p226, %p227
      %s230 = sadd.s32 %s229, 1
      %p233 = scmp.eq.s32.totalorder %s23, 1
      %p234 = scmp.ne.s32.totalorder %s229, %s231
      %p235 = scmp.eq.s32.totalorder %s23, 0
      %p236 = por %p234, %p235
      %p237 = scmp.ne.s32.totalorder %s229, %s231
      %p238 = scmp.eq.s32.totalorder %s28, 1
      %p239 = por %p237, %p238
      %p240 = scmp.ne.s32.totalorder %s231, %s232
      %p241 = scmp.eq.s32.totalorder %s28, 0
      %p242 = por %p240, %p241
      %p243 = scmp.ne.s32.totalorder %s231, %s232
      %p244 = scmp.eq.s32.totalorder %s29, 1
      %p245 = por %p243, %p244
      %p247 = scmp.ne.s32.totalorder %s232, %s246
      %p248 = scmp.eq.s32.totalorder %s29, 0
      %p249 = por %p247, %p248
      %s251 = sadd.s32 %s250, 1
      %p254 = scmp.eq.s32.totalorder %s23, 1
      %p255 = scmp.ne.s32.totalorder %s250, %s252
      %p256 = scmp.eq.s32.totalorder %s23, 0
      %p257 = por %p255, %p256
      %p258 = scmp.ne.s32.totalorder %s250, %s252
      %p259 = scmp.eq.s32.totalorder %s28, 1
      %p260 = por %p258, %p259
      %p261 = scmp.ne.s32.totalorder %s252, %s253
      %p262 = scmp.eq.s32.totalorder %s28, 0
      %p263 = por %p261, %p262
      %p264 = scmp.ne.s32.totalorder %s252, %s253
      %p265 = scmp.eq.s32.totalorder %s29, 1
      %p266 = por %p264, %p265
      %p268 = scmp.ne.s32.totalorder %s253, %s267
      %p269 = scmp.eq.s32.totalorder %s29, 0
      %p270 = por %p268, %p269
      %s272 = sadd.s32 %s271, 1
      %p275 = scmp.eq.s32.totalorder %s23, 1
      %p276 = scmp.ne.s32.totalorder %s271, %s273
      %p277 = scmp.eq.s32.totalorder %s23, 0
      %p278 = por %p276, %p277
      %p279 = scmp.ne.s32.totalorder %s271, %s273
      %p280 = scmp.eq.s32.totalorder %s28, 1
      %p281 = por %p279, %p280
      %p282 = scmp.ne.s32.totalorder %s273, %s274
      %p283 = scmp.eq.s32.totalorder %s28, 0
      %p284 = por %p282, %p283
      %p285 = scmp.ne.s32.totalorder %s273, %s274
      %p286 = scmp.eq.s32.totalorder %s29, 1
      %p287 = por %p285, %p286
      %p289 = scmp.ne.s32.totalorder %s274, %s288
      %p290 = scmp.eq.s32.totalorder %s29, 0
      %p291 = por %p289, %p290
      %s293 = sadd.s32 %s292, 1
      %p296 = scmp.eq.s32.totalorder %s23, 1
      %p297 = scmp.ne.s32.totalorder %s292, %s294
      %p298 = scmp.eq.s32.totalorder %s23, 0
      %p299 = por %p297, %p298
      %p300 = scmp.ne.s32.totalorder %s292, %s294
      %p301 = scmp.eq.s32.totalorder %s28, 1
      %p302 = por %p300, %p301
      %p303 = scmp.ne.s32.totalorder %s294, %s295
      %p304 = scmp.eq.s32.totalorder %s28, 0
      %p305 = por %p303, %p304
      %p306 = scmp.ne.s32.totalorder %s294, %s295
      %p307 = scmp.eq.s32.totalorder %s29, 1
      %p308 = por %p306, %p307
      %p310 = scmp.ne.s32.totalorder %s295, %s309
      %p311 = scmp.eq.s32.totalorder %s29, 0
      %p312 = por %p310, %p311
      %s313 = ssub.s32 %s30, %s42
      %s314 = ssub.s32 %s31, %s38
      %s315 = sor.u32 %s313, %s314
      %p316 = scmp.eq.s32.totalorder %s315, 0
      %s318 = sadd.s32 %s317, 1
      %s319 = scalar_select %p316, %s317, %s318
      %p322 = pneg %p316
      %p323 = scmp.eq.s32.totalorder %s23, 1
      %p324 = por %p322, %p323
      %p325 = scmp.ne.s32.totalorder %s317, %s320
      %p326 = scmp.eq.s32.totalorder %s23, 0
      %p327 = por %p325, %p326
      %p328 = scmp.ne.s32.totalorder %s317, %s320
      %p329 = scmp.eq.s32.totalorder %s28, 1
      %p330 = por %p328, %p329
      %p331 = scmp.ne.s32.totalorder %s320, %s321
      %p332 = scmp.eq.s32.totalorder %s28, 0
      %p333 = por %p331, %p332
      %p334 = scmp.ne.s32.totalorder %s320, %s321
      %p335 = scmp.eq.s32.totalorder %s29, 1
      %p336 = por %p334, %p335
      %p338 = scmp.ne.s32.totalorder %s321, %s337
      %p339 = scmp.eq.s32.totalorder %s29, 0
      %p340 = por %p338, %p339
      %s341 = ssub.s32 %s30, %s42
      %s342 = ssub.s32 %s31, %s38
      %s343 = sor.u32 %s341, %s342
      %p344 = scmp.eq.s32.totalorder %s343, 0
      %s346 = sadd.s32 %s345, 1
      %s347 = scalar_select %p344, %s345, %s346
      %p350 = pneg %p344
      %p351 = scmp.eq.s32.totalorder %s23, 1
      %p352 = por %p350, %p351
      %p353 = scmp.ne.s32.totalorder %s345, %s348
      %p354 = scmp.eq.s32.totalorder %s23, 0
      %p355 = por %p353, %p354
      %p356 = scmp.ne.s32.totalorder %s345, %s348
      %p357 = scmp.eq.s32.totalorder %s28, 1
      %p358 = por %p356, %p357
      %p359 = scmp.ne.s32.totalorder %s348, %s349
      %p360 = scmp.eq.s32.totalorder %s28, 0
      %p361 = por %p359, %p360
      %p362 = scmp.ne.s32.totalorder %s348, %s349
      %p363 = scmp.eq.s32.totalorder %s29, 1
      %p364 = por %p362, %p363
      %p366 = scmp.ne.s32.totalorder %s349, %s365
      %p367 = scmp.eq.s32.totalorder %s29, 0
      %p368 = por %p366, %p367
      %s369 = ssub.s32 %s30, %s42
      %s370 = ssub.s32 %s31, %s38
      %s371 = sor.u32 %s369, %s370
      %p372 = scmp.eq.s32.totalorder %s371, 0
      %s374 = sadd.s32 %s373, 1
      %s375 = scalar_select %p372, %s373, %s374
      %p378 = pneg %p372
      %p379 = scmp.eq.s32.totalorder %s23, 1
      %p380 = por %p378, %p379
      %p381 = scmp.ne.s32.totalorder %s373, %s376
      %p382 = scmp.eq.s32.totalorder %s23, 0
      %p383 = por %p381, %p382
      %p384 = scmp.ne.s32.totalorder %s373, %s376
      %p385 = scmp.eq.s32.totalorder %s28, 1
      %p386 = por %p384, %p385
      %p387 = scmp.ne.s32.totalorder %s376, %s377
      %p388 = scmp.eq.s32.totalorder %s28, 0
      %p389 = por %p387, %p388
      %p390 = scmp.ne.s32.totalorder %s376, %s377
      %p391 = scmp.eq.s32.totalorder %s29, 1
      %p392 = por %p390, %p391
      %p394 = scmp.ne.s32.totalorder %s377, %s393
      %p395 = scmp.eq.s32.totalorder %s29, 0
      %p396 = por %p394, %p395
      %p397 = scmp.le.s32.totalorder 1, %s23
      %p398 = scmp.lt.s32.totalorder %s23, 3
      %p399 = pnand %p397, %p398
      %p400 = pneg %p399
      // Predicated region
      $region9: #{tpu_custom_call.1} parent=5 // pred_check
        _
      $region10: #{tpu_custom_call.1} parent=5 // pred_check_branch
        %402 = sbr.rel (%p399) target = $region12
      $region11: #{tpu_custom_call.1} parent=5 // pred_region
        %s403 = ssub.s32 %s23, 1
        // Predicated region
        $region13: #{tpu_custom_call.1} parent=11 // pred_check
          %p404 = pneg %p242
        $region14: #{tpu_custom_call.1} parent=11 // pred_check_branch
          %406 = sbr.rel (%p404) target = $region16
        $region15: #{tpu_custom_call.1} parent=11 // pred_region
          _
        $region16: #{tpu_custom_call.1} parent=11 // pred_fallthru
          _
        // Predicated region
        $region17: #{tpu_custom_call.1} parent=11 // pred_check
          %p407 = pneg %p263
        $region18: #{tpu_custom_call.1} parent=11 // pred_check_branch
          %409 = sbr.rel (%p407) target = $region20
        $region19: #{tpu_custom_call.1} parent=11 // pred_region
          _
        $region20: #{tpu_custom_call.1} parent=11 // pred_fallthru
          _
        // Predicated region
        $region21: #{tpu_custom_call.1} parent=11 // pred_check
          %p410 = pneg %p284
        $region22: #{tpu_custom_call.1} parent=11 // pred_check_branch
          %412 = sbr.rel (%p410) target = $region24
        $region23: #{tpu_custom_call.1} parent=11 // pred_region
          _
        $region24: #{tpu_custom_call.1} parent=11 // pred_fallthru
          _
        // Predicated region
        $region25: #{tpu_custom_call.1} parent=11 // pred_check
          %p413 = pneg %p305
        $region26: #{tpu_custom_call.1} parent=11 // pred_check_branch
          %415 = sbr.rel (%p413) target = $region28
        $region27: #{tpu_custom_call.1} parent=11 // pred_region
          _
        $region28: #{tpu_custom_call.1} parent=11 // pred_fallthru
          _
      $region12: #{tpu_custom_call.1} parent=5 // pred_fallthru
        _
      %p416 = scmp.lt.s32.totalorder %s23, 2
      // Predicated region
      $region29: #{tpu_custom_call.1} parent=5 // pred_check
        %p417 = pneg %p416
      $region30: #{tpu_custom_call.1} parent=5 // pred_check_branch
        %419 = sbr.rel (%p417) target = $region32
      $region31: #{tpu_custom_call.1} parent=5 // pred_region
        // Predicated region
        $region33: #{tpu_custom_call.1} parent=31 // pred_check
          %p420 = pneg %p57
        $region34: #{tpu_custom_call.1} parent=31 // pred_check_branch
          %422 = sbr.rel (%p420) target = $region36
        $region35: #{tpu_custom_call.1} parent=31 // pred_region
          %s423 = smul.u32 2, %s31
          %p424 = scmp.lt.s32.totalorder %s30, 1
          %s425 = scalar_select %p424, %s30, 1
          %p426 = scmp.lt.s32.totalorder %s423, 1
          %s427 = scalar_select %p426, %s423, 1
          %s428 = smul.addr %s425, 4
          %s429 = sadd.s32 %s427, %s428
          %s430 = smul.addr %s429, 4
          %s431 = scalar_lea.vmem %s0, %s430
          %s432 = smul.u32 2, %s31
        $region36: #{tpu_custom_call.1} parent=31 // pred_fallthru
          _
        // Predicated region
        $region37: #{tpu_custom_call.1} parent=31 // pred_check
          %p433 = pneg %p85
        $region38: #{tpu_custom_call.1} parent=31 // pred_check_branch
          %435 = sbr.rel (%p433) target = $region40
        $region39: #{tpu_custom_call.1} parent=31 // pred_region
          %s436 = smul.u32 2, %s31
          %p437 = scmp.lt.s32.totalorder %s30, 1
          %s438 = scalar_select %p437, %s30, 1
          %p439 = scmp.lt.s32.totalorder %s436, 1
          %s440 = scalar_select %p439, %s436, 1
          %s441 = smul.addr %s438, 10
          %s442 = sadd.s32 %s440, %s441
          %s443 = smul.addr %s442, 4
          %s444 = scalar_lea.vmem %s1, %s443
          %s445 = smul.u32 2, %s31
        $region40: #{tpu_custom_call.1} parent=31 // pred_fallthru
          _
        // Predicated region
        $region41: #{tpu_custom_call.1} parent=31 // pred_check
          %p446 = pneg %p111
        $region42: #{tpu_custom_call.1} parent=31 // pred_check_branch
          %448 = sbr.rel (%p446) target = $region44
        $region43: #{tpu_custom_call.1} parent=31 // pred_region
          %p449 = scmp.lt.s32.totalorder %s30, 1
          %s450 = scalar_select %p449, %s30, 1
          %s451 = smul.addr %s450, 5
          %s452 = smul.addr %s451, 8
          %s453 = scalar_lea.vmem %s2, %s452
        $region44: #{tpu_custom_call.1} parent=31 // pred_fallthru
          _
        // Predicated region
        $region45: #{tpu_custom_call.1} parent=31 // pred_check
          %p454 = pneg %p137
        $region46: #{tpu_custom_call.1} parent=31 // pred_check_branch
          %456 = sbr.rel (%p454) target = $region48
        $region47: #{tpu_custom_call.1} parent=31 // pred_region
          %p457 = scmp.lt.s32.totalorder %s30, 1
          %s458 = scalar_select %p457, %s30, 1
          %s459 = smul.addr %s458, 5
          %s460 = smul.addr %s459, 8
          %s461 = scalar_lea.vmem %s3, %s460
        $region48: #{tpu_custom_call.1} parent=31 // pred_fallthru
          _
        // Predicated region
        $region49: #{tpu_custom_call.1} parent=31 // pred_check
          %p462 = pneg %p163
        $region50: #{tpu_custom_call.1} parent=31 // pred_check_branch
          %464 = sbr.rel (%p462) target = $region52
        $region51: #{tpu_custom_call.1} parent=31 // pred_region
          %p465 = scmp.lt.s32.totalorder %s30, 1
          %s466 = scalar_select %p465, %s30, 1
          %s467 = smul.addr %s466, 2
          %s468 = smul.addr %s467, 8
          %s469 = scalar_lea.vmem %s4, %s468
        $region52: #{tpu_custom_call.1} parent=31 // pred_fallthru
          _
        // Predicated region
        $region53: #{tpu_custom_call.1} parent=31 // pred_check
          %p470 = pneg %p189
        $region54: #{tpu_custom_call.1} parent=31 // pred_check_branch
          %472 = sbr.rel (%p470) target = $region56
        $region55: #{tpu_custom_call.1} parent=31 // pred_region
          %p473 = scmp.lt.s32.totalorder %s30, 1
          %s474 = scalar_select %p473, %s30, 1
          %s475 = smul.addr %s474, 2
          %s476 = smul.addr %s475, 8
          %s477 = scalar_lea.vmem %s5, %s476
        $region56: #{tpu_custom_call.1} parent=31 // pred_fallthru
          _
        // Predicated region
        $region57: #{tpu_custom_call.1} parent=31 // pred_check
          %p478 = pneg %p215
        $region58: #{tpu_custom_call.1} parent=31 // pred_check_branch
          %480 = sbr.rel (%p478) target = $region60
        $region59: #{tpu_custom_call.1} parent=31 // pred_region
          %p481 = scmp.lt.s32.totalorder %s30, 1
          %s482 = scalar_select %p481, %s30, 1
          %s483 = smul.addr %s482, 16
          %s484 = smul.addr %s483, 8
          %s485 = scalar_lea.vmem %s6, %s484
        $region60: #{tpu_custom_call.1} parent=31 // pred_fallthru
          _
      $region32: #{tpu_custom_call.1} parent=5 // pred_fallthru
        _
      %p486 = scmp.le.s32.totalorder 1, %s23
      %p487 = scmp.lt.s32.totalorder %s23, 3
      %p488 = pnand %p486, %p487
      %p489 = pneg %p488
      // Predicated region
      $region61: #{tpu_custom_call.1} parent=5 // pred_check
        _
      $region62: #{tpu_custom_call.1} parent=5 // pred_check_branch
        %491 = sbr.rel (%p488) target = $region64
      $region63: #{tpu_custom_call.1} parent=5 // pred_region
        %s492 = ssub.s32 %s23, 1
        %s493 = smul.u32 2, %s33
        %p494 = scmp.lt.s32.totalorder %s32, 1
        %s495 = scalar_select %p494, %s32, 1
        %p496 = scmp.lt.s32.totalorder %s493, 1
        %s497 = scalar_select %p496, %s493, 1
        %s498 = smul.addr %s495, 4
        %s499 = sadd.s32 %s497, %s498
        %s500 = smul.addr %s499, 4
        %s501 = scalar_lea.vmem %s0, %s500
        %p502 = pneg %p63
        %p503 = pneg %p60
        %s504 = smul.u32 2, %s33
        %p505 = scmp.lt.s32.totalorder %s32, 1
        %s506 = scalar_select %p505, %s32, 1
        %p507 = scmp.lt.s32.totalorder %s504, 1
        %s508 = scalar_select %p507, %s504, 1
        %s509 = smul.addr %s506, 10
        %s510 = sadd.s32 %s508, %s509
        %s511 = smul.addr %s510, 4
        %s512 = scalar_lea.vmem %s1, %s511
        %p513 = pneg %p91
        %p514 = pneg %p88
        %p515 = scmp.lt.s32.totalorder %s32, 1
        %s516 = scalar_select %p515, %s32, 1
        %s517 = smul.addr %s516, 5
        %s518 = smul.addr %s517, 8
        %s519 = scalar_lea.vmem %s2, %s518
        %p520 = pneg %p117
        %p521 = pneg %p114
        %p522 = scmp.lt.s32.totalorder %s32, 1
        %s523 = scalar_select %p522, %s32, 1
        %s524 = smul.addr %s523, 5
        %s525 = smul.addr %s524, 8
        %s526 = scalar_lea.vmem %s3, %s525
        %p527 = pneg %p143
        %p528 = pneg %p140
        %p529 = scmp.lt.s32.totalorder %s32, 1
        %s530 = scalar_select %p529, %s32, 1
        %s531 = smul.addr %s530, 2
        %s532 = smul.addr %s531, 8
        %s533 = scalar_lea.vmem %s4, %s532
        %p534 = pneg %p169
        %p535 = pneg %p166
        %p536 = scmp.lt.s32.totalorder %s32, 1
        %s537 = scalar_select %p536, %s32, 1
        %s538 = smul.addr %s537, 2
        %s539 = smul.addr %s538, 8
        %s540 = scalar_lea.vmem %s5, %s539
        %p541 = pneg %p195
        %p542 = pneg %p192
        %p543 = scmp.lt.s32.totalorder %s32, 1
        %s544 = scalar_select %p543, %s32, 1
        %s545 = smul.addr %s544, 16
        %s546 = smul.addr %s545, 8
        %s547 = scalar_lea.vmem %s6, %s546
        %p548 = pneg %p221
        %p549 = pneg %p218
        %p550 = pneg %p242
        %p551 = pneg %p239
        %p552 = pneg %p263
        %p553 = pneg %p260
        %p554 = pneg %p284
        %p555 = pneg %p281
        %p556 = pneg %p305
        %p557 = pneg %p302
        %p558 = pneg %p333
        %p559 = pneg %p330
        %s560 = sand.u32 %s320, 1
        %s561 = scalar_lea.sflag [#allocation3], %s560
        %s562 = sand.u32 %s320, 1
        %s563 = smul.addr %s562, 128
        %s564 = scalar_lea.vmem [#allocation2], %s563
        %p565 = pneg %p361
        %p566 = pneg %p358
        %p567 = scmp.lt.s32.totalorder %s32, 1
        %s568 = scalar_select %p567, %s32, 1
        %p569 = scmp.lt.s32.totalorder %s33, 0
        %s570 = scalar_select %p569, %s33, 0
        %s571 = smul.addr %s570, 16
        %s572 = smul.addr %s568, 16
        %s573 = sadd.s32 %s571, %s572
        %s574 = smul.addr %s573, 8
        %s575 = scalar_lea.vmem %s12, %s574
        %p576 = pneg %p389
        %p577 = pneg %p386
        %p578 = scmp.lt.s32.totalorder %s32, 1
        %s579 = scalar_select %p578, %s32, 1
        %p580 = scmp.lt.s32.totalorder %s33, 0
        %s581 = scalar_select %p580, %s33, 0
        %s582 = smul.addr %s581, 16
        %s583 = smul.addr %s579, 16
        %s584 = sadd.s32 %s582, %s583
        %s585 = smul.addr %s584, 8
        %s586 = scalar_lea.vmem %s13, %s585
        %s587 = smul.u32 2, %s33
        %p588 = scmp.lt.s32.totalorder %s32, 1
        %s589 = scalar_select %p588, %s32, 1
        %p590 = scmp.lt.s32.totalorder %s587, 1
        %s591 = scalar_select %p590, %s587, 1
        %s592 = smul.addr %s589, 4
        %s593 = sadd.s32 %s591, %s592
        %s594 = smul.addr %s593, 4
        %s595 = scalar_lea.vmem %s0, %s594
        %s596 = smul.u32 2, %s33
        %s597 = smul.u32 2, %s33
        %p598 = scmp.lt.s32.totalorder %s32, 1
        %s599 = scalar_select %p598, %s32, 1
        %p600 = scmp.lt.s32.totalorder %s597, 1
        %s601 = scalar_select %p600, %s597, 1
        %s602 = smul.addr %s599, 10
        %s603 = sadd.s32 %s601, %s602
        %s604 = smul.addr %s603, 4
        %s605 = scalar_lea.vmem %s1, %s604
        %s606 = smul.u32 2, %s33
        %p607 = scmp.lt.s32.totalorder %s32, 1
        %s608 = scalar_select %p607, %s32, 1
        %s609 = smul.addr %s608, 5
        %s610 = smul.addr %s609, 8
        %s611 = scalar_lea.vmem %s2, %s610
        %p612 = scmp.lt.s32.totalorder %s32, 1
        %s613 = scalar_select %p612, %s32, 1
        %s614 = smul.addr %s613, 5
        %s615 = smul.addr %s614, 8
        %s616 = scalar_lea.vmem %s3, %s615
        %p617 = scmp.lt.s32.totalorder %s32, 1
        %s618 = scalar_select %p617, %s32, 1
        %s619 = smul.addr %s618, 2
        %s620 = smul.addr %s619, 8
        %s621 = scalar_lea.vmem %s4, %s620
        %p622 = scmp.lt.s32.totalorder %s32, 1
        %s623 = scalar_select %p622, %s32, 1
        %s624 = smul.addr %s623, 2
        %s625 = smul.addr %s624, 8
        %s626 = scalar_lea.vmem %s5, %s625
        %p627 = scmp.lt.s32.totalorder %s32, 1
        %s628 = scalar_select %p627, %s32, 1
        %s629 = smul.addr %s628, 16
        %s630 = smul.addr %s629, 8
        %s631 = scalar_lea.vmem %s6, %s630
        %s632 = smul.u32 2, %s33
        %p633 = scmp.lt.s32.totalorder %s32, 1
        %s634 = scalar_select %p633, %s32, 1
        %p635 = scmp.lt.s32.totalorder %s33, 0
        %s636 = scalar_select %p635, %s33, 0
        %s637 = smul.addr %s636, 16
        %s638 = smul.addr %s634, 16
        %s639 = sadd.s32 %s637, %s638
        %s640 = smul.addr %s639, 8
        %s641 = scalar_lea.vmem %s12, %s640
        %p642 = scmp.lt.s32.totalorder %s32, 1
        %s643 = scalar_select %p642, %s32, 1
        %p644 = scmp.lt.s32.totalorder %s33, 0
        %s645 = scalar_select %p644, %s33, 0
        %s646 = smul.addr %s645, 16
        %s647 = smul.addr %s643, 16
        %s648 = sadd.s32 %s646, %s647
        %s649 = smul.addr %s648, 8
        %s650 = scalar_lea.vmem %s13, %s649
        %v652 = vld [vmem:[%s605] sm:$0xff]
        %v653 = vld [vmem:[%s605 + $0x8] sm:$0xff]
        %v654 = vld [vmem:[%s605 + $0x10] sm:$0xff]
        %v655 = vld [vmem:[%s605 + $0x18] sm:$0xff]
        %v656 = vld [vmem:[%s605 + $0x20] sm:$0x11]
        %v657 = vunpack.c.l.bf16 %v652
        %v658 = vunpack.c.h.bf16 %v652
        %v659 = vunpack.c.l.bf16 %v653
        %v660 = vunpack.c.h.bf16 %v653
        %v661 = vunpack.c.l.bf16 %v654
        %v662 = vunpack.c.h.bf16 %v654
        %v663 = vunpack.c.l.bf16 %v655
        %v664 = vunpack.c.h.bf16 %v655
        %v665 = vunpack.c.l.bf16 %v656
        %v666 = vunpack.c.h.bf16 %v656
        %v667 = vld [vmem:[%s611] sm:$0xff]
        %v668 = vld [vmem:[%s611 + $0x8] sm:$0xff]
        %v669 = vld [vmem:[%s611 + $0x10] sm:$0xff]
        %v670 = vld [vmem:[%s611 + $0x18] sm:$0xff]
        %v671 = vld [vmem:[%s611 + $0x20] sm:$0x3]
        %v672 = vadd.f32 %v667, 1.0
        %v673 = vadd.f32 %v668, 1.0
        %v674 = vadd.f32 %v669, 1.0
        %v675 = vadd.f32 %v670, 1.0
        %v676 = vadd.f32 %v671, 1.0
        %678 = vset.pattern.permute.xlu0 0
        %679 = vperm.xlu0 %678, %v672
        %v680 = vpop.permute.xlu0 %679
        %683 = vset.pattern.permute.xlu0 0
        %684 = vperm.xlu0 %683, %v673
        %v685 = vpop.permute.xlu0 %684
        %688 = vset.pattern.permute.xlu0 0
        %689 = vperm.xlu0 %688, %v674
        %v690 = vpop.permute.xlu0 %689
        %693 = vset.pattern.permute.xlu0 0
        %694 = vperm.xlu0 %693, %v675
        %v695 = vpop.permute.xlu0 %694
        %698 = vset.pattern.permute.xlu0 0
        %699 = vperm.xlu0 %698, %v676
        %v700 = vpop.permute.xlu0 %699
        %v702 = vmul.f32 %v657, %v680
        %v703 = vmul.f32 %v658, %v680
        %v704 = vmul.f32 %v659, %v685
        %v705 = vmul.f32 %v660, %v685
        %v706 = vmul.f32 %v661, %v690
        %v707 = vmul.f32 %v662, %v690
        %v708 = vmul.f32 %v663, %v695
        %v709 = vmul.f32 %v664, %v695
        %v710 = vmul.f32 %v665, %v700
        %v711 = vmul.f32 %v666, %v700
        %v712 = vld [vmem:[%s616] sm:$0xff]
        %v713 = vld [vmem:[%s616 + $0x8] sm:$0xff]
        %v714 = vld [vmem:[%s616 + $0x10] sm:$0xff]
        %v715 = vld [vmem:[%s616 + $0x18] sm:$0xff]
        %v716 = vld [vmem:[%s616 + $0x20] sm:$0x3]
        %718 = vset.pattern.permute.xlu0 0
        %719 = vperm.xlu0 %718, %v712
        %v720 = vpop.permute.xlu0 %719
        %723 = vset.pattern.permute.xlu0 0
        %724 = vperm.xlu0 %723, %v713
        %v725 = vpop.permute.xlu0 %724
        %728 = vset.pattern.permute.xlu0 0
        %729 = vperm.xlu0 %728, %v714
        %v730 = vpop.permute.xlu0 %729
        %733 = vset.pattern.permute.xlu0 0
        %734 = vperm.xlu0 %733, %v715
        %v735 = vpop.permute.xlu0 %734
        %738 = vset.pattern.permute.xlu0 0
        %739 = vperm.xlu0 %738, %v716
        %v740 = vpop.permute.xlu0 %739
        %v742 = vadd.f32 %v702, %v720
        %v743 = vadd.f32 %v703, %v720
        %v744 = vadd.f32 %v704, %v725
        %v745 = vadd.f32 %v705, %v725
        %v746 = vadd.f32 %v706, %v730
        %v747 = vadd.f32 %v707, %v730
        %v748 = vadd.f32 %v708, %v735
        %v749 = vadd.f32 %v709, %v735
        %v750 = vadd.f32 %v710, %v740
        %v751 = vadd.f32 %v711, %v740
        %v752 = vpack.c.bf16 %v744, %v742
        %v753 = vpack.c.bf16 %v745, %v743
        %v754 = vpack.c.bf16 %v748, %v746
        %v755 = vpack.c.bf16 %v749, %v747
        %v756 = vpack.c.bf16 %v750, %v750
        %v757 = vpack.c.bf16 %v751, %v751
        %v758 = vld [vmem:[%s7] sm:$0xf]
        %v759 = vld [vmem:[%s7 + $0x4] sm:$0x1]
        %v760 = vld [vmem:[%s621] sm:$0xff]
        %v761 = vld [vmem:[%s621 + $0x8] sm:$0x3]
        %763 = vset.pattern.permute.xlu0 0
        %764 = vperm.xlu0 %763, %v760
        %v765 = vpop.permute.xlu0 %764
        %768 = vset.pattern.permute.xlu0 0
        %769 = vperm.xlu0 %768, %v761
        %v770 = vpop.permute.xlu0 %769
        %v774 = vunpack.c.l.b16 %v758
        %v775 = vunpack.c.l.b16 %v759
        %v776 = vpack.c.b16 %v775, %v774
        %vm777 = vcmask 277504
        %v779 = vsel %vm777, %v776, 0
        %vm781 = vcmask 1040384
        %v783 = vsel %vm781, %v756, 0
        %v786 = vsel %vm781, %v757, 0
        %788 = vmatprep.subr.bf16.mxu0 %v753
        %789 = vmatpush1.bf16.msra.mxu0 %v752
        %790 = vmatprep.subr.bf16.mxu0 %v755
        %791 = vmatpush1.bf16.msra.mxu0 %v754
        %792 = vmatprep.subr.bf16.mxu0 %v786
        %793 = vmatpush1.bf16.msra.mxu0 %v783
        %794 = vmatprep.subr.bf16.mxu0 0
        %795 = vmatpush1.bf16.msra.mxu0 0
        %796 = vmatprep.subr.bf16.mxu0 0
        %797 = vmatpush1.bf16.msra.mxu0 0
        %798 = vmatprep.subr.bf16.mxu0 0
        %799 = vmatpush1.bf16.msra.mxu0 0
        %800 = vmatprep.subr.bf16.mxu0 0
        %801 = vmatpush1.bf16.msra.mxu0 0
        %802 = vmatprep.subr.bf16.mxu0 0
        %803 = vmatpush1.bf16.msra.mxu0 0
        %804 = vmatprep.subr.bf16.mxu0 0
        %805 = vmatpush1.bf16.msra.mxu0 0
        %806 = vmatprep.subr.bf16.mxu0 0
        %807 = vmatpush1.bf16.msra.mxu0 0
        %808 = vmatprep.subr.bf16.mxu0 0
        %809 = vmatpush1.bf16.msra.mxu0 0
        %810 = vmatprep.subr.bf16.mxu0 0
        %811 = vmatpush1.bf16.msra.mxu0 0
        %812 = vmatprep.subr.bf16.mxu0 0
        %813 = vmatpush1.bf16.msra.mxu0 0
        %814 = vmatprep.subr.bf16.mxu0 0
        %815 = vmatpush1.bf16.msra.mxu0 0
        %816 = vmatprep.subr.bf16.mxu0 0
        %817 = vmatpush1.bf16.msra.mxu0 0
        %818 = vmatprep.subr.bf16.mxu0 0
        %819 = vmatpush1.bf16.msra.mxu0 0
        %820 = vmatprep.mubr.bf16.mxu0 0
        %821 = vmatmul.mubr.bf16.gmra.mrb[0].mxu0 %v779
        %v822 = vpop.f32.mrb[0].mxu0
        %v823 = vadd.f32 %v765, %v822
        %v824 = vpop.f32.mrb[0].mxu0
        %v825 = vadd.f32 %v765, %v824
        %v826 = vpop.f32.mrb[0].mxu0
        %v827 = vadd.f32 %v770, %v826
        %v828 = vpop.f32.mrb[0].mxu0
        %v829 = vadd.f32 %v770, %v828
        %830 = vdwg.mxu0
        %v831 = vld [vmem:[%s8] sm:$0xf]
        %v832 = vld [vmem:[%s8 + $0x4] sm:$0x1]
        %v833 = vld [vmem:[%s626] sm:$0xff]
        %v834 = vld [vmem:[%s626 + $0x8] sm:$0x3]
        %836 = vset.pattern.permute.xlu0 0
        %837 = vperm.xlu0 %836, %v833
        %v838 = vpop.permute.xlu0 %837
        %841 = vset.pattern.permute.xlu0 0
        %842 = vperm.xlu0 %841, %v834
        %v843 = vpop.permute.xlu0 %842
        %v847 = vunpack.c.l.b16 %v831
        %v848 = vunpack.c.l.b16 %v832
        %v849 = vpack.c.b16 %v848, %v847
        %v851 = vsel %vm777, %v849, 0
        %853 = vmatprep.subr.bf16.mxu0 %v753
        %854 = vmatpush1.bf16.msra.mxu0 %v752
        %855 = vmatprep.subr.bf16.mxu0 %v755
        %856 = vmatpush1.bf16.msra.mxu0 %v754
        %857 = vmatprep.subr.bf16.mxu0 %v786
        %858 = vmatpush1.bf16.msra.mxu0 %v783
        %859 = vmatprep.subr.bf16.mxu0 0
        %860 = vmatpush1.bf16.msra.mxu0 0
        %861 = vmatprep.subr.bf16.mxu0 0
        %862 = vmatpush1.bf16.msra.mxu0 0
        %863 = vmatprep.subr.bf16.mxu0 0
        %864 = vmatpush1.bf16.msra.mxu0 0
        %865 = vmatprep.subr.bf16.mxu0 0
        %866 = vmatpush1.bf16.msra.mxu0 0
        %867 = vmatprep.subr.bf16.mxu0 0
        %868 = vmatpush1.bf16.msra.mxu0 0
        %869 = vmatprep.subr.bf16.mxu0 0
        %870 = vmatpush1.bf16.msra.mxu0 0
        %871 = vmatprep.subr.bf16.mxu0 0
        %872 = vmatpush1.bf16.msra.mxu0 0
        %873 = vmatprep.subr.bf16.mxu0 0
        %874 = vmatpush1.bf16.msra.mxu0 0
        %875 = vmatprep.subr.bf16.mxu0 0
        %876 = vmatpush1.bf16.msra.mxu0 0
        %877 = vmatprep.subr.bf16.mxu0 0
        %878 = vmatpush1.bf16.msra.mxu0 0
        %879 = vmatprep.subr.bf16.mxu0 0
        %880 = vmatpush1.bf16.msra.mxu0 0
        %881 = vmatprep.subr.bf16.mxu0 0
        %882 = vmatpush1.bf16.msra.mxu0 0
        %883 = vmatprep.subr.bf16.mxu0 0
        %884 = vmatpush1.bf16.msra.mxu0 0
        %885 = vmatprep.mubr.bf16.mxu0 0
        %886 = vmatmul.mubr.bf16.gmra.mrb[0].mxu0 %v851
        %v887 = vpop.f32.mrb[0].mxu0
        %v888 = vadd.f32 %v838, %v887
        %v889 = vpop.f32.mrb[0].mxu0
        %v890 = vadd.f32 %v838, %v889
        %v891 = vpop.f32.mrb[0].mxu0
        %v892 = vadd.f32 %v843, %v891
        %v893 = vpop.f32.mrb[0].mxu0
        %v894 = vadd.f32 %v843, %v893
        %895 = vdwg.mxu0
        %v896 = vld [vmem:[%s595] sm:$0xff]
        %v897 = vld [vmem:[%s595 + $0x8] sm:$0x11]
        %v898 = vunpack.c.l.bf16 %v896
        %v899 = vunpack.c.h.bf16 %v896
        %v900 = vunpack.c.l.bf16 %v897
        %v901 = vunpack.c.h.bf16 %v897
        %v902 = vadd.f32 %v823, 1.0
        %v903 = vadd.f32 %v825, 1.0
        %v904 = vadd.f32 %v827, 1.0
        %v905 = vadd.f32 %v829, 1.0
        %v906 = vmul.f32 %v898, %v902
        %v907 = vmul.f32 %v899, %v903
        %v908 = vmul.f32 %v900, %v904
        %v909 = vmul.f32 %v901, %v905
        %v910 = vadd.f32 %v906, %v888
        %v911 = vadd.f32 %v907, %v890
        %v912 = vadd.f32 %v908, %v892
        %v913 = vadd.f32 %v909, %v894
        %v914 = vld [vmem:[%s9] sm:$0xf]
        %v915 = vld [vmem:[%s9 + $0x4] sm:$0xf]
        %v916 = vld [vmem:[%s9 + $0x8] sm:$0xf]
        %v917 = vld [vmem:[%s9 + $0xc] sm:$0xf]
        %v918 = vld [vmem:[%s9 + $0x10] sm:$0xf]
        %v919 = vld [vmem:[%s9 + $0x14] sm:$0xf]
        %v920 = vld [vmem:[%s9 + $0x18] sm:$0xf]
        %v921 = vld [vmem:[%s9 + $0x1c] sm:$0xf]
        %v922 = vld [vmem:[%s9 + $0x20] sm:$0xf]
        %v923 = vld [vmem:[%s9 + $0x24] sm:$0xf]
        %v924 = vld [vmem:[%s9 + $0x28] sm:$0xf]
        %v925 = vld [vmem:[%s9 + $0x2c] sm:$0xf]
        %v926 = vld [vmem:[%s9 + $0x30] sm:$0xf]
        %v927 = vld [vmem:[%s9 + $0x34] sm:$0xf]
        %v928 = vld [vmem:[%s9 + $0x38] sm:$0xf]
        %v929 = vld [vmem:[%s9 + $0x3c] sm:$0xf]
        %v930 = vpack.c.bf16 %v912, %v910
        %v931 = vpack.c.bf16 %v913, %v911
        %v932 = vld [vmem:[%s10] sm:$0xf]
        %v933 = vld [vmem:[%s10 + $0x4] sm:$0xf]
        %v934 = vld [vmem:[%s10 + $0x8] sm:$0xf]
        %v935 = vld [vmem:[%s10 + $0xc] sm:$0xf]
        %v936 = vld [vmem:[%s10 + $0x10] sm:$0xf]
        %v937 = vld [vmem:[%s10 + $0x14] sm:$0xf]
        %v938 = vld [vmem:[%s10 + $0x18] sm:$0xf]
        %v939 = vld [vmem:[%s10 + $0x1c] sm:$0xf]
        %v940 = vld [vmem:[%s10 + $0x20] sm:$0xf]
        %v941 = vld [vmem:[%s10 + $0x24] sm:$0xf]
        %v942 = vld [vmem:[%s10 + $0x28] sm:$0xf]
        %v943 = vld [vmem:[%s10 + $0x2c] sm:$0xf]
        %v944 = vld [vmem:[%s10 + $0x30] sm:$0xf]
        %v945 = vld [vmem:[%s10 + $0x34] sm:$0xf]
        %v946 = vld [vmem:[%s10 + $0x38] sm:$0xf]
        %v947 = vld [vmem:[%s10 + $0x3c] sm:$0xf]
        %v964 = vunpack.c.l.b16 %v932
        %v965 = vunpack.c.l.b16 %v933
        %v966 = vunpack.c.l.b16 %v934
        %v967 = vunpack.c.l.b16 %v935
        %v968 = vunpack.c.l.b16 %v936
        %v969 = vunpack.c.l.b16 %v937
        %v970 = vunpack.c.l.b16 %v938
        %v971 = vunpack.c.l.b16 %v939
        %v972 = vunpack.c.l.b16 %v940
        %v973 = vunpack.c.l.b16 %v941
        %v974 = vunpack.c.l.b16 %v942
        %v975 = vunpack.c.l.b16 %v943
        %v976 = vunpack.c.l.b16 %v944
        %v977 = vunpack.c.l.b16 %v945
        %v978 = vunpack.c.l.b16 %v946
        %v979 = vunpack.c.l.b16 %v947
        %v980 = vpack.c.b16 %v965, %v964
        %v981 = vpack.c.b16 %v967, %v966
        %v982 = vpack.c.b16 %v969, %v968
        %v983 = vpack.c.b16 %v971, %v970
        %v984 = vpack.c.b16 %v973, %v972
        %v985 = vpack.c.b16 %v975, %v974
        %v986 = vpack.c.b16 %v977, %v976
        %v987 = vpack.c.b16 %v979, %v978
        %v989 = vsel %vm777, %v980, 0
        %v992 = vsel %vm777, %v981, 0
        %v995 = vsel %vm777, %v982, 0
        %v998 = vsel %vm777, %v983, 0
        %v1001 = vsel %vm777, %v984, 0
        %v1004 = vsel %vm777, %v985, 0
        %v1007 = vsel %vm777, %v986, 0
        %v1010 = vsel %vm777, %v987, 0
        %1012 = vmatprep.subr.bf16.mxu0 %v753
        %1013 = vmatpush1.bf16.msra.mxu0 %v752
        %1014 = vmatprep.subr.bf16.mxu0 %v755
        %1015 = vmatpush1.bf16.msra.mxu0 %v754
        %1016 = vmatprep.subr.bf16.mxu0 %v786
        %1017 = vmatpush1.bf16.msra.mxu0 %v783
        %1018 = vmatprep.subr.bf16.mxu0 0
        %1019 = vmatpush1.bf16.msra.mxu0 0
        %1020 = vmatprep.subr.bf16.mxu0 0
        %1021 = vmatpush1.bf16.msra.mxu0 0
        %1022 = vmatprep.subr.bf16.mxu0 0
        %1023 = vmatpush1.bf16.msra.mxu0 0
        %1024 = vmatprep.subr.bf16.mxu0 0
        %1025 = vmatpush1.bf16.msra.mxu0 0
        %1026 = vmatprep.subr.bf16.mxu0 0
        %1027 = vmatpush1.bf16.msra.mxu0 0
        %1028 = vmatprep.subr.bf16.mxu0 0
        %1029 = vmatpush1.bf16.msra.mxu0 0
        %1030 = vmatprep.subr.bf16.mxu0 0
        %1031 = vmatpush1.bf16.msra.mxu0 0
        %1032 = vmatprep.subr.bf16.mxu0 0
        %1033 = vmatpush1.bf16.msra.mxu0 0
        %1034 = vmatprep.subr.bf16.mxu0 0
        %1035 = vmatpush1.bf16.msra.mxu0 0
        %1036 = vmatprep.subr.bf16.mxu0 0
        %1037 = vmatpush1.bf16.msra.mxu0 0
        %1038 = vmatprep.subr.bf16.mxu0 0
        %1039 = vmatpush1.bf16.msra.mxu0 0
        %1040 = vmatprep.subr.bf16.mxu0 0
        %1041 = vmatpush1.bf16.msra.mxu0 0
        %1042 = vmatprep.subr.bf16.mxu0 0
        %1043 = vmatpush1.bf16.msra.mxu0 0
        %1044 = vmatprep.mubr.bf16.mxu0 0
        %1045 = vmatmul.mubr.bf16.gmra.mrb[0].mxu0 %v989
        %v1046 = vpop.f32.mrb[0].mxu0
        %v1047 = vadd.f32 0.0, %v1046
        %v1048 = vpop.f32.mrb[0].mxu0
        %v1049 = vadd.f32 0.0, %v1048
        %v1050 = vpop.f32.mrb[0].mxu0
        %v1051 = vadd.f32 0.0, %v1050
        %v1052 = vpop.f32.mrb[0].mxu0
        %v1053 = vadd.f32 0.0, %v1052
        %1054 = vmatprep.mubr.bf16.mxu0 0
        %1055 = vmatmul.mubr.bf16.gmra.mrb[0].mxu0 %v992
        %v1056 = vpop.f32.mrb[0].mxu0
        %v1057 = vadd.f32 0.0, %v1056
        %v1058 = vpop.f32.mrb[0].mxu0
        %v1059 = vadd.f32 0.0, %v1058
        %v1060 = vpop.f32.mrb[0].mxu0
        %v1061 = vadd.f32 0.0, %v1060
        %v1062 = vpop.f32.mrb[0].mxu0
        %v1063 = vadd.f32 0.0, %v1062
        %1064 = vmatprep.mubr.bf16.mxu0 0
        %1065 = vmatmul.mubr.bf16.gmra.mrb[0].mxu0 %v995
        %v1066 = vpop.f32.mrb[0].mxu0
        %v1067 = vadd.f32 0.0, %v1066
        %v1068 = vpop.f32.mrb[0].mxu0
        %v1069 = vadd.f32 0.0, %v1068
        %v1070 = vpop.f32.mrb[0].mxu0
        %v1071 = vadd.f32 0.0, %v1070
        %v1072 = vpop.f32.mrb[0].mxu0
        %v1073 = vadd.f32 0.0, %v1072
        %1074 = vmatprep.mubr.bf16.mxu0 0
        %1075 = vmatmul.mubr.bf16.gmra.mrb[0].mxu0 %v998
        %v1076 = vpop.f32.mrb[0].mxu0
        %v1077 = vadd.f32 0.0, %v1076
        %v1078 = vpop.f32.mrb[0].mxu0
        %v1079 = vadd.f32 0.0, %v1078
        %v1080 = vpop.f32.mrb[0].mxu0
        %v1081 = vadd.f32 0.0, %v1080
        %v1082 = vpop.f32.mrb[0].mxu0
        %v1083 = vadd.f32 0.0, %v1082
        %1084 = vmatprep.mubr.bf16.mxu0 0
        %1085 = vmatmul.mubr.bf16.gmra.mrb[0].mxu0 %v1001
        %v1086 = vpop.f32.mrb[0].mxu0
        %v1087 = vadd.f32 0.0, %v1086
        %v1088 = vpop.f32.mrb[0].mxu0
        %v1089 = vadd.f32 0.0, %v1088
        %v1090 = vpop.f32.mrb[0].mxu0
        %v1091 = vadd.f32 0.0, %v1090
        %v1092 = vpop.f32.mrb[0].mxu0
        %v1093 = vadd.f32 0.0, %v1092
        %1094 = vmatprep.mubr.bf16.mxu0 0
        %1095 = vmatmul.mubr.bf16.gmra.mrb[0].mxu0 %v1004
        %v1096 = vpop.f32.mrb[0].mxu0
        %v1097 = vadd.f32 0.0, %v1096
        %v1098 = vpop.f32.mrb[0].mxu0
        %v1099 = vadd.f32 0.0, %v1098
        %v1100 = vpop.f32.mrb[0].mxu0
        %v1101 = vadd.f32 0.0, %v1100
        %v1102 = vpop.f32.mrb[0].mxu0
        %v1103 = vadd.f32 0.0, %v1102
        %1104 = vmatprep.mubr.bf16.mxu0 0
        %1105 = vmatmul.mubr.bf16.gmra.mrb[0].mxu0 %v1007
        %v1106 = vpop.f32.mrb[0].mxu0
        %v1107 = vadd.f32 0.0, %v1106
        %v1108 = vpop.f32.mrb[0].mxu0
        %v1109 = vadd.f32 0.0, %v1108
        %v1110 = vpop.f32.mrb[0].mxu0
        %v1111 = vadd.f32 0.0, %v1110
        %v1112 = vpop.f32.mrb[0].mxu0
        %v1113 = vadd.f32 0.0, %v1112
        %1114 = vmatprep.mubr.bf16.mxu0 0
        %1115 = vmatmul.mubr.bf16.gmra.mrb[0].mxu0 %v1010
        %v1116 = vpop.f32.mrb[0].mxu0
        %v1117 = vadd.f32 0.0, %v1116
        %v1118 = vpop.f32.mrb[0].mxu0
        %v1119 = vadd.f32 0.0, %v1118
        %v1120 = vpop.f32.mrb[0].mxu0
        %v1121 = vadd.f32 0.0, %v1120
        %v1122 = vpop.f32.mrb[0].mxu0
        %v1123 = vadd.f32 0.0, %v1122
        %1124 = vdwg.mxu0
        %v1141 = vunpack.c.l.b16 %v914
        %v1142 = vunpack.c.l.b16 %v915
        %v1143 = vunpack.c.l.b16 %v916
        %v1144 = vunpack.c.l.b16 %v917
        %v1145 = vunpack.c.l.b16 %v918
        %v1146 = vunpack.c.l.b16 %v919
        %v1147 = vunpack.c.l.b16 %v920
        %v1148 = vunpack.c.l.b16 %v921
        %v1149 = vunpack.c.l.b16 %v922
        %v1150 = vunpack.c.l.b16 %v923
        %v1151 = vunpack.c.l.b16 %v924
        %v1152 = vunpack.c.l.b16 %v925
        %v1153 = vunpack.c.l.b16 %v926
        %v1154 = vunpack.c.l.b16 %v927
        %v1155 = vunpack.c.l.b16 %v928
        %v1156 = vunpack.c.l.b16 %v929
        %v1157 = vpack.c.b16 %v1142, %v1141
        %v1158 = vpack.c.b16 %v1144, %v1143
        %v1159 = vpack.c.b16 %v1146, %v1145
        %v1160 = vpack.c.b16 %v1148, %v1147
        %v1161 = vpack.c.b16 %v1150, %v1149
        %v1162 = vpack.c.b16 %v1152, %v1151
        %v1163 = vpack.c.b16 %v1154, %v1153
        %v1164 = vpack.c.b16 %v1156, %v1155
        %vm1165 = vcmask 80896
        %v1167 = vsel %vm1165, %v1157, 0
        %v1170 = vsel %vm1165, %v1158, 0
        %v1173 = vsel %vm1165, %v1159, 0
        %v1176 = vsel %vm1165, %v1160, 0
        %v1179 = vsel %vm1165, %v1161, 0
        %v1182 = vsel %vm1165, %v1162, 0
        %v1185 = vsel %vm1165, %v1163, 0
        %v1188 = vsel %vm1165, %v1164, 0
        %vm1190 = vcmask 1044480
        %v1192 = vsel %vm1190, %v930, 0
        %v1195 = vsel %vm1190, %v931, 0
        %1197 = vmatprep.subr.bf16.mxu0 %v1195
        %1198 = vmatpush1.bf16.msra.mxu0 %v1192
        %1199 = vmatprep.subr.bf16.mxu0 0
        %1200 = vmatpush1.bf16.msra.mxu0 0
        %1201 = vmatprep.subr.bf16.mxu0 0
        %1202 = vmatpush1.bf16.msra.mxu0 0
        %1203 = vmatprep.subr.bf16.mxu0 0
        %1204 = vmatpush1.bf16.msra.mxu0 0
        %1205 = vmatprep.subr.bf16.mxu0 0
        %1206 = vmatpush1.bf16.msra.mxu0 0
        %1207 = vmatprep.subr.bf16.mxu0 0
        %1208 = vmatpush1.bf16.msra.mxu0 0
        %1209 = vmatprep.subr.bf16.mxu0 0
        %1210 = vmatpush1.bf16.msra.mxu0 0
        %1211 = vmatprep.subr.bf16.mxu0 0
        %1212 = vmatpush1.bf16.msra.mxu0 0
        %1213 = vmatprep.subr.bf16.mxu0 0
        %1214 = vmatpush1.bf16.msra.mxu0 0
        %1215 = vmatprep.subr.bf16.mxu0 0
        %1216 = vmatpush1.bf16.msra.mxu0 0
        %1217 = vmatprep.subr.bf16.mxu0 0
        %1218 = vmatpush1.bf16.msra.mxu0 0
        %1219 = vmatprep.subr.bf16.mxu0 0
        %1220 = vmatpush1.bf16.msra.mxu0 0
        %1221 = vmatprep.subr.bf16.mxu0 0
        %1222 = vmatpush1.bf16.msra.mxu0 0
        %1223 = vmatprep.subr.bf16.mxu0 0
        %1224 = vmatpush1.bf16.msra.mxu0 0
        %1225 = vmatprep.subr.bf16.mxu0 0
        %1226 = vmatpush1.bf16.msra.mxu0 0
        %1227 = vmatprep.subr.bf16.mxu0 0
        %1228 = vmatpush1.bf16.msra.mxu0 0
        %1229 = vmatprep.mubr.bf16.mxu0 0
        %1230 = vmatmul.mubr.bf16.gmra.mrb[0].mxu0 %v1167
        %v1231 = vpop.f32.mrb[0].mxu0
        %v1232 = vadd.f32 %v1047, %v1231
        %v1233 = vpop.f32.mrb[0].mxu0
        %v1234 = vadd.f32 %v1049, %v1233
        %v1235 = vpop.f32.mrb[0].mxu0
        %v1236 = vadd.f32 %v1051, %v1235
        %v1237 = vpop.f32.mrb[0].mxu0
        %v1238 = vadd.f32 %v1053, %v1237
        %1239 = vmatprep.mubr.bf16.mxu0 0
        %1240 = vmatmul.mubr.bf16.gmra.mrb[0].mxu0 %v1170
        %v1241 = vpop.f32.mrb[0].mxu0
        %v1242 = vadd.f32 %v1057, %v1241
        %v1243 = vpop.f32.mrb[0].mxu0
        %v1244 = vadd.f32 %v1059, %v1243
        %v1245 = vpop.f32.mrb[0].mxu0
        %v1246 = vadd.f32 %v1061, %v1245
        %v1247 = vpop.f32.mrb[0].mxu0
        %v1248 = vadd.f32 %v1063, %v1247
        %1249 = vmatprep.mubr.bf16.mxu0 0
        %1250 = vmatmul.mubr.bf16.gmra.mrb[0].mxu0 %v1173
        %v1251 = vpop.f32.mrb[0].mxu0
        %v1252 = vadd.f32 %v1067, %v1251
        %v1253 = vpop.f32.mrb[0].mxu0
        %v1254 = vadd.f32 %v1069, %v1253
        %v1255 = vpop.f32.mrb[0].mxu0
        %v1256 = vadd.f32 %v1071, %v1255
        %v1257 = vpop.f32.mrb[0].mxu0
        %v1258 = vadd.f32 %v1073, %v1257
        %1259 = vmatprep.mubr.bf16.mxu0 0
        %1260 = vmatmul.mubr.bf16.gmra.mrb[0].mxu0 %v1176
        %v1261 = vpop.f32.mrb[0].mxu0
        %v1262 = vadd.f32 %v1077, %v1261
        %v1263 = vpop.f32.mrb[0].mxu0
        %v1264 = vadd.f32 %v1079, %v1263
        %v1265 = vpop.f32.mrb[0].mxu0
        %v1266 = vadd.f32 %v1081, %v1265
        %v1267 = vpop.f32.mrb[0].mxu0
        %v1268 = vadd.f32 %v1083, %v1267
        %1269 = vmatprep.mubr.bf16.mxu0 0
        %1270 = vmatmul.mubr.bf16.gmra.mrb[0].mxu0 %v1179
        %v1271 = vpop.f32.mrb[0].mxu0
        %v1272 = vadd.f32 %v1087, %v1271
        %v1273 = vpop.f32.mrb[0].mxu0
        %v1274 = vadd.f32 %v1089, %v1273
        %v1275 = vpop.f32.mrb[0].mxu0
        %v1276 = vadd.f32 %v1091, %v1275
        %v1277 = vpop.f32.mrb[0].mxu0
        %v1278 = vadd.f32 %v1093, %v1277
        %1279 = vmatprep.mubr.bf16.mxu0 0
        %1280 = vmatmul.mubr.bf16.gmra.mrb[0].mxu0 %v1182
        %v1281 = vpop.f32.mrb[0].mxu0
        %v1282 = vadd.f32 %v1097, %v1281
        %v1283 = vpop.f32.mrb[0].mxu0
        %v1284 = vadd.f32 %v1099, %v1283
        %v1285 = vpop.f32.mrb[0].mxu0
        %v1286 = vadd.f32 %v1101, %v1285
        %v1287 = vpop.f32.mrb[0].mxu0
        %v1288 = vadd.f32 %v1103, %v1287
        %1289 = vmatprep.mubr.bf16.mxu0 0
        %1290 = vmatmul.mubr.bf16.gmra.mrb[0].mxu0 %v1185
        %v1291 = vpop.f32.mrb[0].mxu0
        %v1292 = vadd.f32 %v1107, %v1291
        %v1293 = vpop.f32.mrb[0].mxu0
        %v1294 = vadd.f32 %v1109, %v1293
        %v1295 = vpop.f32.mrb[0].mxu0
        %v1296 = vadd.f32 %v1111, %v1295
        %v1297 = vpop.f32.mrb[0].mxu0
        %v1298 = vadd.f32 %v1113, %v1297
        %1299 = vmatprep.mubr.bf16.mxu0 0
        %1300 = vmatmul.mubr.bf16.gmra.mrb[0].mxu0 %v1188
        %v1301 = vpop.f32.mrb[0].mxu0
        %v1302 = vadd.f32 %v1117, %v1301
        %v1303 = vpop.f32.mrb[0].mxu0
        %v1304 = vadd.f32 %v1119, %v1303
        %v1305 = vpop.f32.mrb[0].mxu0
        %v1306 = vadd.f32 %v1121, %v1305
        %v1307 = vpop.f32.mrb[0].mxu0
        %v1308 = vadd.f32 %v1123, %v1307
        %1309 = vdwg.mxu0
        %v1310 = vld [vmem:[%s631] sm:$0xff]
        %v1311 = vld [vmem:[%s631 + $0x8] sm:$0xff]
        %v1312 = vld [vmem:[%s631 + $0x10] sm:$0xff]
        %v1313 = vld [vmem:[%s631 + $0x18] sm:$0xff]
        %v1314 = vld [vmem:[%s631 + $0x20] sm:$0xff]
        %v1315 = vld [vmem:[%s631 + $0x28] sm:$0xff]
        %v1316 = vld [vmem:[%s631 + $0x30] sm:$0xff]
        %v1317 = vld [vmem:[%s631 + $0x38] sm:$0xff]
        %v1318 = vld [vmem:[%s631 + $0x40] sm:$0xff]
        %v1319 = vld [vmem:[%s631 + $0x48] sm:$0xff]
        %v1320 = vld [vmem:[%s631 + $0x50] sm:$0xff]
        %v1321 = vld [vmem:[%s631 + $0x58] sm:$0xff]
        %v1322 = vld [vmem:[%s631 + $0x60] sm:$0xff]
        %v1323 = vld [vmem:[%s631 + $0x68] sm:$0xff]
        %v1324 = vld [vmem:[%s631 + $0x70] sm:$0xff]
        %v1325 = vld [vmem:[%s631 + $0x78] sm:$0xff]
        %1327 = vset.pattern.permute.xlu0 0
        %1328 = vperm.xlu0 %1327, %v1310
        %v1329 = vpop.permute.xlu0 %1328
        %1332 = vset.pattern.permute.xlu0 0
        %1333 = vperm.xlu0 %1332, %v1311
        %v1334 = vpop.permute.xlu0 %1333
        %1337 = vset.pattern.permute.xlu0 0
        %1338 = vperm.xlu0 %1337, %v1312
        %v1339 = vpop.permute.xlu0 %1338
        %1342 = vset.pattern.permute.xlu0 0
        %1343 = vperm.xlu0 %1342, %v1313
        %v1344 = vpop.permute.xlu0 %1343
        %1347 = vset.pattern.permute.xlu0 0
        %1348 = vperm.xlu0 %1347, %v1314
        %v1349 = vpop.permute.xlu0 %1348
        %1352 = vset.pattern.permute.xlu0 0
        %1353 = vperm.xlu0 %1352, %v1315
        %v1354 = vpop.permute.xlu0 %1353
        %1357 = vset.pattern.permute.xlu0 0
        %1358 = vperm.xlu0 %1357, %v1316
        %v1359 = vpop.permute.xlu0 %1358
        %1362 = vset.pattern.permute.xlu0 0
        %1363 = vperm.xlu0 %1362, %v1317
        %v1364 = vpop.permute.xlu0 %1363
        %1367 = vset.pattern.permute.xlu0 0
        %1368 = vperm.xlu0 %1367, %v1318
        %v1369 = vpop.permute.xlu0 %1368
        %1372 = vset.pattern.permute.xlu0 0
        %1373 = vperm.xlu0 %1372, %v1319
        %v1374 = vpop.permute.xlu0 %1373
        %1377 = vset.pattern.permute.xlu0 0
        %1378 = vperm.xlu0 %1377, %v1320
        %v1379 = vpop.permute.xlu0 %1378
        %1382 = vset.pattern.permute.xlu0 0
        %1383 = vperm.xlu0 %1382, %v1321
        %v1384 = vpop.permute.xlu0 %1383
        %1387 = vset.pattern.permute.xlu0 0
        %1388 = vperm.xlu0 %1387, %v1322
        %v1389 = vpop.permute.xlu0 %1388
        %1392 = vset.pattern.permute.xlu0 0
        %1393 = vperm.xlu0 %1392, %v1323
        %v1394 = vpop.permute.xlu0 %1393
        %1397 = vset.pattern.permute.xlu0 0
        %1398 = vperm.xlu0 %1397, %v1324
        %v1399 = vpop.permute.xlu0 %1398
        %1402 = vset.pattern.permute.xlu0 0
        %1403 = vperm.xlu0 %1402, %v1325
        %v1404 = vpop.permute.xlu0 %1403
        %v1406 = vadd.f32 %v1232, %v1329
        %v1407 = vadd.f32 %v1234, %v1329
        %v1408 = vadd.f32 %v1236, %v1334
        %v1409 = vadd.f32 %v1238, %v1334
        %v1410 = vadd.f32 %v1242, %v1339
        %v1411 = vadd.f32 %v1244, %v1339
        %v1412 = vadd.f32 %v1246, %v1344
        %v1413 = vadd.f32 %v1248, %v1344
        %v1414 = vadd.f32 %v1252, %v1349
        %v1415 = vadd.f32 %v1254, %v1349
        %v1416 = vadd.f32 %v1256, %v1354
        %v1417 = vadd.f32 %v1258, %v1354
        %v1418 = vadd.f32 %v1262, %v1359
        %v1419 = vadd.f32 %v1264, %v1359
        %v1420 = vadd.f32 %v1266, %v1364
        %v1421 = vadd.f32 %v1268, %v1364
        %v1422 = vadd.f32 %v1272, %v1369
        %v1423 = vadd.f32 %v1274, %v1369
        %v1424 = vadd.f32 %v1276, %v1374
        %v1425 = vadd.f32 %v1278, %v1374
        %v1426 = vadd.f32 %v1282, %v1379
        %v1427 = vadd.f32 %v1284, %v1379
        %v1428 = vadd.f32 %v1286, %v1384
        %v1429 = vadd.f32 %v1288, %v1384
        %v1430 = vadd.f32 %v1292, %v1389
        %v1431 = vadd.f32 %v1294, %v1389
        %v1432 = vadd.f32 %v1296, %v1394
        %v1433 = vadd.f32 %v1298, %v1394
        %v1434 = vadd.f32 %v1302, %v1399
        %v1435 = vadd.f32 %v1304, %v1399
        %v1436 = vadd.f32 %v1306, %v1404
        %v1437 = vadd.f32 %v1308, %v1404
        %v1438 = vmul.f32 %v1406, 0.2
        %v1439 = vmul.f32 %v1407, 0.2
        %v1440 = vmul.f32 %v1408, 0.2
        %v1441 = vmul.f32 %v1409, 0.2
        %v1442 = vmul.f32 %v1410, 0.2
        %v1443 = vmul.f32 %v1411, 0.2
        %v1444 = vmul.f32 %v1412, 0.2
        %v1445 = vmul.f32 %v1413, 0.2
        %v1446 = vmul.f32 %v1414, 0.2
        %v1447 = vmul.f32 %v1415, 0.2
        %v1448 = vmul.f32 %v1416, 0.2
        %v1449 = vmul.f32 %v1417, 0.2
        %v1450 = vmul.f32 %v1418, 0.2
        %v1451 = vmul.f32 %v1419, 0.2
        %v1452 = vmul.f32 %v1420, 0.2
        %v1453 = vmul.f32 %v1421, 0.2
        %v1454 = vmul.f32 %v1422, 0.2
        %v1455 = vmul.f32 %v1423, 0.2
        %v1456 = vmul.f32 %v1424, 0.2
        %v1457 = vmul.f32 %v1425, 0.2
        %v1458 = vmul.f32 %v1426, 0.2
        %v1459 = vmul.f32 %v1427, 0.2
        %v1460 = vmul.f32 %v1428, 0.2
        %v1461 = vmul.f32 %v1429, 0.2
        %v1462 = vmul.f32 %v1430, 0.2
        %v1463 = vmul.f32 %v1431, 0.2
        %v1464 = vmul.f32 %v1432, 0.2
        %v1465 = vmul.f32 %v1433, 0.2
        %v1466 = vmul.f32 %v1434, 0.2
        %v1467 = vmul.f32 %v1435, 0.2
        %v1468 = vmul.f32 %v1436, 0.2
        %v1469 = vmul.f32 %v1437, 0.2
        %v1470 = vmax.f32 %v1406, %v1438
        %v1471 = vmax.f32 %v1407, %v1439
        %v1472 = vmax.f32 %v1408, %v1440
        %v1473 = vmax.f32 %v1409, %v1441
        %v1474 = vmax.f32 %v1410, %v1442
        %v1475 = vmax.f32 %v1411, %v1443
        %v1476 = vmax.f32 %v1412, %v1444
        %v1477 = vmax.f32 %v1413, %v1445
        %v1478 = vmax.f32 %v1414, %v1446
        %v1479 = vmax.f32 %v1415, %v1447
        %v1480 = vmax.f32 %v1416, %v1448
        %v1481 = vmax.f32 %v1417, %v1449
        %v1482 = vmax.f32 %v1418, %v1450
        %v1483 = vmax.f32 %v1419, %v1451
        %v1484 = vmax.f32 %v1420, %v1452
        %v1485 = vmax.f32 %v1421, %v1453
        %v1486 = vmax.f32 %v1422, %v1454
        %v1487 = vmax.f32 %v1423, %v1455
        %v1488 = vmax.f32 %v1424, %v1456
        %v1489 = vmax.f32 %v1425, %v1457
        %v1490 = vmax.f32 %v1426, %v1458
        %v1491 = vmax.f32 %v1427, %v1459
        %v1492 = vmax.f32 %v1428, %v1460
        %v1493 = vmax.f32 %v1429, %v1461
        %v1494 = vmax.f32 %v1430, %v1462
        %v1495 = vmax.f32 %v1431, %v1463
        %v1496 = vmax.f32 %v1432, %v1464
        %v1497 = vmax.f32 %v1433, %v1465
        %v1498 = vmax.f32 %v1434, %v1466
        %v1499 = vmax.f32 %v1435, %v1467
        %v1500 = vmax.f32 %v1436, %v1468
        %v1501 = vmax.f32 %v1437, %v1469
        %s1502 = smul.u32 %s33, 256
        %v1503 = vlaneseq
        %v1504 = vand.u32 %v1503, 127
        %v1505 = vadd.s32 %v1504, 128
        %v1506 = vstv %s1502
        %v1507 = vadd.s32 %v1506, %v1504
        %v1508 = vadd.s32 %v1506, %v1505
        %vm1509 = vcmp.lt.s32.totalorder %v1507, 256
        %vm1510 = vcmp.lt.s32.totalorder %v1508, 256
        %v1511 = vsel %vm1509, 1, 0
        %v1512 = vsel %vm1510, 1, 0
        %vm1513 = vcmp.eq.s32.totalorder %v1511, 1
        %vm1514 = vcmp.eq.s32.totalorder %v1512, 1
        %v1515 = vsel %vm1513, %v1470, 0.0
        %v1516 = vsel %vm1514, %v1471, 0.0
        %v1517 = vsel %vm1513, %v1472, 0.0
        %v1518 = vsel %vm1514, %v1473, 0.0
        %v1519 = vsel %vm1513, %v1474, 0.0
        %v1520 = vsel %vm1514, %v1475, 0.0
        %v1521 = vsel %vm1513, %v1476, 0.0
        %v1522 = vsel %vm1514, %v1477, 0.0
        %v1523 = vsel %vm1513, %v1478, 0.0
        %v1524 = vsel %vm1514, %v1479, 0.0
        %v1525 = vsel %vm1513, %v1480, 0.0
        %v1526 = vsel %vm1514, %v1481, 0.0
        %v1527 = vsel %vm1513, %v1482, 0.0
        %v1528 = vsel %vm1514, %v1483, 0.0
        %v1529 = vsel %vm1513, %v1484, 0.0
        %v1530 = vsel %vm1514, %v1485, 0.0
        %v1531 = vsel %vm1513, %v1486, 0.0
        %v1532 = vsel %vm1514, %v1487, 0.0
        %v1533 = vsel %vm1513, %v1488, 0.0
        %v1534 = vsel %vm1514, %v1489, 0.0
        %v1535 = vsel %vm1513, %v1490, 0.0
        %v1536 = vsel %vm1514, %v1491, 0.0
        %v1537 = vsel %vm1513, %v1492, 0.0
        %v1538 = vsel %vm1514, %v1493, 0.0
        %v1539 = vsel %vm1513, %v1494, 0.0
        %v1540 = vsel %vm1514, %v1495, 0.0
        %v1541 = vsel %vm1513, %v1496, 0.0
        %v1542 = vsel %vm1514, %v1497, 0.0
        %v1543 = vsel %vm1513, %v1498, 0.0
        %v1544 = vsel %vm1514, %v1499, 0.0
        %v1545 = vsel %vm1513, %v1500, 0.0
        %v1546 = vsel %vm1514, %v1501, 0.0
        %v1547 = vadd.f32 %v1515, %v1516
        %1548 = vadd.xlane.f32.xlu0 %v1547
        %v1549 = vpop.xlane.xlu0 %1548
        %v1550 = vadd.f32 %v1517, %v1518
        %1551 = vadd.xlane.f32.xlu0 %v1550
        %v1552 = vpop.xlane.xlu0 %1551
        %v1553 = vadd.f32 %v1519, %v1520
        %1554 = vadd.xlane.f32.xlu0 %v1553
        %v1555 = vpop.xlane.xlu0 %1554
        %v1556 = vadd.f32 %v1521, %v1522
        %1557 = vadd.xlane.f32.xlu0 %v1556
        %v1558 = vpop.xlane.xlu0 %1557
        %v1559 = vadd.f32 %v1523, %v1524
        %1560 = vadd.xlane.f32.xlu0 %v1559
        %v1561 = vpop.xlane.xlu0 %1560
        %v1562 = vadd.f32 %v1525, %v1526
        %1563 = vadd.xlane.f32.xlu0 %v1562
        %v1564 = vpop.xlane.xlu0 %1563
        %v1565 = vadd.f32 %v1527, %v1528
        %1566 = vadd.xlane.f32.xlu0 %v1565
        %v1567 = vpop.xlane.xlu0 %1566
        %v1568 = vadd.f32 %v1529, %v1530
        %1569 = vadd.xlane.f32.xlu0 %v1568
        %v1570 = vpop.xlane.xlu0 %1569
        %v1571 = vadd.f32 %v1531, %v1532
        %1572 = vadd.xlane.f32.xlu0 %v1571
        %v1573 = vpop.xlane.xlu0 %1572
        %v1574 = vadd.f32 %v1533, %v1534
        %1575 = vadd.xlane.f32.xlu0 %v1574
        %v1576 = vpop.xlane.xlu0 %1575
        %v1577 = vadd.f32 %v1535, %v1536
        %1578 = vadd.xlane.f32.xlu0 %v1577
        %v1579 = vpop.xlane.xlu0 %1578
        %v1580 = vadd.f32 %v1537, %v1538
        %1581 = vadd.xlane.f32.xlu0 %v1580
        %v1582 = vpop.xlane.xlu0 %1581
        %v1583 = vadd.f32 %v1539, %v1540
        %1584 = vadd.xlane.f32.xlu0 %v1583
        %v1585 = vpop.xlane.xlu0 %1584
        %v1586 = vadd.f32 %v1541, %v1542
        %1587 = vadd.xlane.f32.xlu0 %v1586
        %v1588 = vpop.xlane.xlu0 %1587
        %v1589 = vadd.f32 %v1543, %v1544
        %1590 = vadd.xlane.f32.xlu0 %v1589
        %v1591 = vpop.xlane.xlu0 %1590
        %v1592 = vadd.f32 %v1545, %v1546
        %1593 = vadd.xlane.f32.xlu0 %v1592
        %v1594 = vpop.xlane.xlu0 %1593
        %vm1595 = vcmask 7168
        %1596 = vst.msk [vmem:[%s641] sm:$0xff] %vm1595, %v1549
        %1597 = vst.msk [vmem:[%s641 + $0x8] sm:$0xff] %vm1595, %v1552
        %1598 = vst.msk [vmem:[%s641 + $0x10] sm:$0xff] %vm1595, %v1555
        %1599 = vst.msk [vmem:[%s641 + $0x18] sm:$0xff] %vm1595, %v1558
        %1600 = vst.msk [vmem:[%s641 + $0x20] sm:$0xff] %vm1595, %v1561
        %1601 = vst.msk [vmem:[%s641 + $0x28] sm:$0xff] %vm1595, %v1564
        %1602 = vst.msk [vmem:[%s641 + $0x30] sm:$0xff] %vm1595, %v1567
        %1603 = vst.msk [vmem:[%s641 + $0x38] sm:$0xff] %vm1595, %v1570
        %1604 = vst.msk [vmem:[%s641 + $0x40] sm:$0xff] %vm1595, %v1573
        %1605 = vst.msk [vmem:[%s641 + $0x48] sm:$0xff] %vm1595, %v1576
        %1606 = vst.msk [vmem:[%s641 + $0x50] sm:$0xff] %vm1595, %v1579
        %1607 = vst.msk [vmem:[%s641 + $0x58] sm:$0xff] %vm1595, %v1582
        %1608 = vst.msk [vmem:[%s641 + $0x60] sm:$0xff] %vm1595, %v1585
        %1609 = vst.msk [vmem:[%s641 + $0x68] sm:$0xff] %vm1595, %v1588
        %1610 = vst.msk [vmem:[%s641 + $0x70] sm:$0xff] %vm1595, %v1591
        %1611 = vst.msk [vmem:[%s641 + $0x78] sm:$0xff] %vm1595, %v1594
        %v1612 = vmul.f32 %v1515, %v1515
        %v1613 = vmul.f32 %v1516, %v1516
        %v1614 = vmul.f32 %v1517, %v1517
        %v1615 = vmul.f32 %v1518, %v1518
        %v1616 = vmul.f32 %v1519, %v1519
        %v1617 = vmul.f32 %v1520, %v1520
        %v1618 = vmul.f32 %v1521, %v1521
        %v1619 = vmul.f32 %v1522, %v1522
        %v1620 = vmul.f32 %v1523, %v1523
        %v1621 = vmul.f32 %v1524, %v1524
        %v1622 = vmul.f32 %v1525, %v1525
        %v1623 = vmul.f32 %v1526, %v1526
        %v1624 = vmul.f32 %v1527, %v1527
        %v1625 = vmul.f32 %v1528, %v1528
        %v1626 = vmul.f32 %v1529, %v1529
        %v1627 = vmul.f32 %v1530, %v1530
        %v1628 = vmul.f32 %v1531, %v1531
        %v1629 = vmul.f32 %v1532, %v1532
        %v1630 = vmul.f32 %v1533, %v1533
        %v1631 = vmul.f32 %v1534, %v1534
        %v1632 = vmul.f32 %v1535, %v1535
        %v1633 = vmul.f32 %v1536, %v1536
        %v1634 = vmul.f32 %v1537, %v1537
        %v1635 = vmul.f32 %v1538, %v1538
        %v1636 = vmul.f32 %v1539, %v1539
        %v1637 = vmul.f32 %v1540, %v1540
        %v1638 = vmul.f32 %v1541, %v1541
        %v1639 = vmul.f32 %v1542, %v1542
        %v1640 = vmul.f32 %v1543, %v1543
        %v1641 = vmul.f32 %v1544, %v1544
        %v1642 = vmul.f32 %v1545, %v1545
        %v1643 = vmul.f32 %v1546, %v1546
        %v1644 = vadd.f32 %v1612, %v1613
        %1645 = vadd.xlane.f32.xlu0 %v1644
        %v1646 = vpop.xlane.xlu0 %1645
        %v1647 = vadd.f32 %v1614, %v1615
        %1648 = vadd.xlane.f32.xlu0 %v1647
        %v1649 = vpop.xlane.xlu0 %1648
        %v1650 = vadd.f32 %v1616, %v1617
        %1651 = vadd.xlane.f32.xlu0 %v1650
        %v1652 = vpop.xlane.xlu0 %1651
        %v1653 = vadd.f32 %v1618, %v1619
        %1654 = vadd.xlane.f32.xlu0 %v1653
        %v1655 = vpop.xlane.xlu0 %1654
        %v1656 = vadd.f32 %v1620, %v1621
        %1657 = vadd.xlane.f32.xlu0 %v1656
        %v1658 = vpop.xlane.xlu0 %1657
        %v1659 = vadd.f32 %v1622, %v1623
        %1660 = vadd.xlane.f32.xlu0 %v1659
        %v1661 = vpop.xlane.xlu0 %1660
        %v1662 = vadd.f32 %v1624, %v1625
        %1663 = vadd.xlane.f32.xlu0 %v1662
        %v1664 = vpop.xlane.xlu0 %1663
        %v1665 = vadd.f32 %v1626, %v1627
        %1666 = vadd.xlane.f32.xlu0 %v1665
        %v1667 = vpop.xlane.xlu0 %1666
        %v1668 = vadd.f32 %v1628, %v1629
        %1669 = vadd.xlane.f32.xlu0 %v1668
        %v1670 = vpop.xlane.xlu0 %1669
        %v1671 = vadd.f32 %v1630, %v1631
        %1672 = vadd.xlane.f32.xlu0 %v1671
        %v1673 = vpop.xlane.xlu0 %1672
        %v1674 = vadd.f32 %v1632, %v1633
        %1675 = vadd.xlane.f32.xlu0 %v1674
        %v1676 = vpop.xlane.xlu0 %1675
        %v1677 = vadd.f32 %v1634, %v1635
        %1678 = vadd.xlane.f32.xlu0 %v1677
        %v1679 = vpop.xlane.xlu0 %1678
        %v1680 = vadd.f32 %v1636, %v1637
        %1681 = vadd.xlane.f32.xlu0 %v1680
        %v1682 = vpop.xlane.xlu0 %1681
        %v1683 = vadd.f32 %v1638, %v1639
        %1684 = vadd.xlane.f32.xlu0 %v1683
        %v1685 = vpop.xlane.xlu0 %1684
        %v1686 = vadd.f32 %v1640, %v1641
        %1687 = vadd.xlane.f32.xlu0 %v1686
        %v1688 = vpop.xlane.xlu0 %1687
        %v1689 = vadd.f32 %v1642, %v1643
        %1690 = vadd.xlane.f32.xlu0 %v1689
        %v1691 = vpop.xlane.xlu0 %1690
        %1692 = vst.msk [vmem:[%s650] sm:$0xff] %vm1595, %v1646
        %1693 = vst.msk [vmem:[%s650 + $0x8] sm:$0xff] %vm1595, %v1649
        %1694 = vst.msk [vmem:[%s650 + $0x10] sm:$0xff] %vm1595, %v1652
        %1695 = vst.msk [vmem:[%s650 + $0x18] sm:$0xff] %vm1595, %v1655
        %1696 = vst.msk [vmem:[%s650 + $0x20] sm:$0xff] %vm1595, %v1658
        %1697 = vst.msk [vmem:[%s650 + $0x28] sm:$0xff] %vm1595, %v1661
        %1698 = vst.msk [vmem:[%s650 + $0x30] sm:$0xff] %vm1595, %v1664
        %1699 = vst.msk [vmem:[%s650 + $0x38] sm:$0xff] %vm1595, %v1667
        %1700 = vst.msk [vmem:[%s650 + $0x40] sm:$0xff] %vm1595, %v1670
        %1701 = vst.msk [vmem:[%s650 + $0x48] sm:$0xff] %vm1595, %v1673
        %1702 = vst.msk [vmem:[%s650 + $0x50] sm:$0xff] %vm1595, %v1676
        %1703 = vst.msk [vmem:[%s650 + $0x58] sm:$0xff] %vm1595, %v1679
        %1704 = vst.msk [vmem:[%s650 + $0x60] sm:$0xff] %vm1595, %v1682
        %1705 = vst.msk [vmem:[%s650 + $0x68] sm:$0xff] %vm1595, %v1685
        %1706 = vst.msk [vmem:[%s650 + $0x70] sm:$0xff] %vm1595, %v1688
        %1707 = vst.msk [vmem:[%s650 + $0x78] sm:$0xff] %vm1595, %v1691
        %v1708 = vpack.c.bf16 %v1472, %v1470
        %v1709 = vpack.c.bf16 %v1473, %v1471
        %v1710 = vpack.c.bf16 %v1476, %v1474
        %v1711 = vpack.c.bf16 %v1477, %v1475
        %v1712 = vpack.c.bf16 %v1480, %v1478
        %v1713 = vpack.c.bf16 %v1481, %v1479
        %v1714 = vpack.c.bf16 %v1484, %v1482
        %v1715 = vpack.c.bf16 %v1485, %v1483
        %v1716 = vpack.c.bf16 %v1488, %v1486
        %v1717 = vpack.c.bf16 %v1489, %v1487
        %v1718 = vpack.c.bf16 %v1492, %v1490
        %v1719 = vpack.c.bf16 %v1493, %v1491
        %v1720 = vpack.c.bf16 %v1496, %v1494
        %v1721 = vpack.c.bf16 %v1497, %v1495
        %v1722 = vpack.c.bf16 %v1500, %v1498
        %v1723 = vpack.c.bf16 %v1501, %v1499
        %v1740 = vunpack.c.l.b16 %v1708
        %v1741 = vunpack.c.l.b16 %v1709
        %v1742 = vunpack.c.h.b16 %v1708
        %v1743 = vunpack.c.h.b16 %v1709
        %v1744 = vunpack.c.l.b16 %v1710
        %v1745 = vunpack.c.l.b16 %v1711
        %v1746 = vunpack.c.h.b16 %v1710
        %v1747 = vunpack.c.h.b16 %v1711
        %v1748 = vunpack.c.l.b16 %v1712
        %v1749 = vunpack.c.l.b16 %v1713
        %v1750 = vunpack.c.h.b16 %v1712
        %v1751 = vunpack.c.h.b16 %v1713
        %v1752 = vunpack.c.l.b16 %v1714
        %v1753 = vunpack.c.l.b16 %v1715
        %v1754 = vunpack.c.h.b16 %v1714
        %v1755 = vunpack.c.h.b16 %v1715
        %v1756 = vunpack.c.l.b16 %v1716
        %v1757 = vunpack.c.l.b16 %v1717
        %v1758 = vunpack.c.h.b16 %v1716
        %v1759 = vunpack.c.h.b16 %v1717
        %v1760 = vunpack.c.l.b16 %v1718
        %v1761 = vunpack.c.l.b16 %v1719
        %v1762 = vunpack.c.h.b16 %v1718
        %v1763 = vunpack.c.h.b16 %v1719
        %v1764 = vunpack.c.l.b16 %v1720
        %v1765 = vunpack.c.l.b16 %v1721
        %v1766 = vunpack.c.h.b16 %v1720
        %v1767 = vunpack.c.h.b16 %v1721
        %v1768 = vunpack.c.l.b16 %v1722
        %v1769 = vunpack.c.l.b16 %v1723
        %v1770 = vunpack.c.h.b16 %v1722
        %v1771 = vunpack.c.h.b16 %v1723
        %v1772 = vpack.c.b16 %v1741, %v1740
        %v1773 = vpack.c.b16 %v1743, %v1742
        %v1774 = vpack.c.b16 %v1745, %v1744
        %v1775 = vpack.c.b16 %v1747, %v1746
        %v1776 = vpack.c.b16 %v1749, %v1748
        %v1777 = vpack.c.b16 %v1751, %v1750
        %v1778 = vpack.c.b16 %v1753, %v1752
        %v1779 = vpack.c.b16 %v1755, %v1754
        %v1780 = vpack.c.b16 %v1757, %v1756
        %v1781 = vpack.c.b16 %v1759, %v1758
        %v1782 = vpack.c.b16 %v1761, %v1760
        %v1783 = vpack.c.b16 %v1763, %v1762
        %v1784 = vpack.c.b16 %v1765, %v1764
        %v1785 = vpack.c.b16 %v1767, %v1766
        %v1786 = vpack.c.b16 %v1769, %v1768
        %v1787 = vpack.c.b16 %v1771, %v1770
        %1804 = vst [vmem:[%s564] sm:$0xff] %v1772
        %1805 = vst [vmem:[%s564 + $0x8] sm:$0xff] %v1773
        %1806 = vst [vmem:[%s564 + $0x10] sm:$0xff] %v1774
        %1807 = vst [vmem:[%s564 + $0x18] sm:$0xff] %v1775
        %1808 = vst [vmem:[%s564 + $0x20] sm:$0xff] %v1776
        %1809 = vst [vmem:[%s564 + $0x28] sm:$0xff] %v1777
        %1810 = vst [vmem:[%s564 + $0x30] sm:$0xff] %v1778
        %1811 = vst [vmem:[%s564 + $0x38] sm:$0xff] %v1779
        %1812 = vst [vmem:[%s564 + $0x40] sm:$0xff] %v1780
        %1813 = vst [vmem:[%s564 + $0x48] sm:$0xff] %v1781
        %1814 = vst [vmem:[%s564 + $0x50] sm:$0xff] %v1782
        %1815 = vst [vmem:[%s564 + $0x58] sm:$0xff] %v1783
        %1816 = vst [vmem:[%s564 + $0x60] sm:$0xff] %v1784
        %1817 = vst [vmem:[%s564 + $0x68] sm:$0xff] %v1785
        %1818 = vst [vmem:[%s564 + $0x70] sm:$0xff] %v1786
        %1819 = vst [vmem:[%s564 + $0x78] sm:$0xff] %v1787
        %s1820 = sand.u32 %s320, 1
        %s1821 = scalar_lea.sflag [#allocation3], %s1820
        %s1822 = sand.u32 %s320, 1
        %s1823 = smul.addr %s1822, 128
        %s1824 = scalar_lea.vmem [#allocation2], %s1823
        %p1825 = scmp.lt.s32.totalorder %s32, 1
        %s1826 = scalar_select %p1825, %s32, 1
        %p1827 = scmp.lt.s32.totalorder %s33, 0
        %s1828 = scalar_select %p1827, %s33, 0
        %s1829 = smul.addr %s1828, 16
        %s1830 = smul.addr %s1826, 16
        %s1831 = sadd.s32 %s1829, %s1830
        %s1832 = smul.addr %s1831, 8
        %s1833 = scalar_lea.vmem %s12, %s1832
        %p1834 = scmp.lt.s32.totalorder %s32, 1
        %s1835 = scalar_select %p1834, %s32, 1
        %p1836 = scmp.lt.s32.totalorder %s33, 0
        %s1837 = scalar_select %p1836, %s33, 0
        %s1838 = smul.addr %s1837, 16
        %s1839 = smul.addr %s1835, 16
        %s1840 = sadd.s32 %s1838, %s1839
        %s1841 = smul.addr %s1840, 8
        %s1842 = scalar_lea.vmem %s13, %s1841
        // Predicated region
        $region65: #{tpu_custom_call.1} parent=63 // pred_check
          %p1843 = pneg %p330
        $region66: #{tpu_custom_call.1} parent=63 // pred_check_branch
          %1845 = sbr.rel (%p1843) target = $region68
        $region67: #{tpu_custom_call.1} parent=63 // pred_region
          %s1846 = smul.u32 2, %s33
          %s1848 = ssub.s32 2048, 2048
          %1849 = vsyncadd %s1821, %s1848
          %s1850 = smul.addr %s32, 32
          %s1851 = sadd.s32 %s1846, %s1850
          %s1852 = smul.addr %s1851, 64
          %s1853 = scalar_lea.hbm %s11, %s1852
          %s1854 = sshll.u32 %s1824, 4
          %s1855 = int_to_ptr.vmem [resolvable:$true] %s1854
          %1860 = dma.vmem_to_hbm [thread:$0]  %s1855, 2048, %s1853, %s1821, 128, 128, 8
        $region68: #{tpu_custom_call.1} parent=63 // pred_fallthru
          _
        // Predicated region
        $region69: #{tpu_custom_call.1} parent=63 // pred_check
          %p1861 = pneg %p358
        $region70: #{tpu_custom_call.1} parent=63 // pred_check_branch
          %1863 = sbr.rel (%p1861) target = $region72
        $region71: #{tpu_custom_call.1} parent=63 // pred_region
          _
        $region72: #{tpu_custom_call.1} parent=63 // pred_fallthru
          _
        // Predicated region
        $region73: #{tpu_custom_call.1} parent=63 // pred_check
          %p1864 = pneg %p386
        $region74: #{tpu_custom_call.1} parent=63 // pred_check_branch
          %1866 = sbr.rel (%p1864) target = $region76
        $region75: #{tpu_custom_call.1} parent=63 // pred_region
          _
        $region76: #{tpu_custom_call.1} parent=63 // pred_fallthru
          _
      $region64: #{tpu_custom_call.1} parent=5 // pred_fallthru
        _
      %p1867 = scmp.le.s32.totalorder 2, %s23
      // Predicated region
      $region77: #{tpu_custom_call.1} parent=5 // pred_check
        %p1868 = pneg %p1867
      $region78: #{tpu_custom_call.1} parent=5 // pred_check_branch
        %1870 = sbr.rel (%p1868) target = $region80
      $region79: #{tpu_custom_call.1} parent=5 // pred_region
        %s1871 = ssub.s32 %s23, 2
        // Predicated region
        $region81: #{tpu_custom_call.1} parent=79 // pred_check
          %p1872 = pneg %p336
        $region82: #{tpu_custom_call.1} parent=79 // pred_check_branch
          %1874 = sbr.rel (%p1872) target = $region84
        $region83: #{tpu_custom_call.1} parent=79 // pred_region
          %s1875 = sand.u32 %s321, 1
          %s1876 = scalar_lea.sflag [#allocation3], %s1875
          %s1877 = sand.u32 %s321, 1
          %s1878 = smul.addr %s1877, 128
          %s1879 = scalar_lea.vmem [#allocation2], %s1878
          %1880 = dma.done %s1876, 2048
        $region84: #{tpu_custom_call.1} parent=79 // pred_fallthru
          _
        // Predicated region
        $region85: #{tpu_custom_call.1} parent=79 // pred_check
          %p1881 = pneg %p364
        $region86: #{tpu_custom_call.1} parent=79 // pred_check_branch
          %1883 = sbr.rel (%p1881) target = $region88
        $region87: #{tpu_custom_call.1} parent=79 // pred_region
          %p1884 = scmp.lt.s32.totalorder %s34, 1
          %s1885 = scalar_select %p1884, %s34, 1
          %p1886 = scmp.lt.s32.totalorder %s35, 0
          %s1887 = scalar_select %p1886, %s35, 0
          %s1888 = smul.addr %s1887, 16
          %s1889 = smul.addr %s1885, 16
          %s1890 = sadd.s32 %s1888, %s1889
          %s1891 = smul.addr %s1890, 8
          %s1892 = scalar_lea.vmem %s12, %s1891
        $region88: #{tpu_custom_call.1} parent=79 // pred_fallthru
          _
        // Predicated region
        $region89: #{tpu_custom_call.1} parent=79 // pred_check
          %p1893 = pneg %p392
        $region90: #{tpu_custom_call.1} parent=79 // pred_check_branch
          %1895 = sbr.rel (%p1893) target = $region92
        $region91: #{tpu_custom_call.1} parent=79 // pred_region
          %p1896 = scmp.lt.s32.totalorder %s34, 1
          %s1897 = scalar_select %p1896, %s34, 1
          %p1898 = scmp.lt.s32.totalorder %s35, 0
          %s1899 = scalar_select %p1898, %s35, 0
          %s1900 = smul.addr %s1899, 16
          %s1901 = smul.addr %s1897, 16
          %s1902 = sadd.s32 %s1900, %s1901
          %s1903 = smul.addr %s1902, 8
          %s1904 = scalar_lea.vmem %s13, %s1903
        $region92: #{tpu_custom_call.1} parent=79 // pred_fallthru
          _
      $region80: #{tpu_custom_call.1} parent=5 // pred_fallthru
        _
    $region6: #{tpu_custom_call.1} parent=1 // loop_footer
      %s27 = sadd.s32 1, %s23
    $region7: #{tpu_custom_call.1} parent=1 // loop_footer_branch
      %22 = sbr.rel target = $region3
    $region8: #{tpu_custom_call.1} parent=1 // loop_exit
      _
    %1905 = vsyncpa [#allocation3], 1
    %s1906 = scalar_lea.sflag [#allocation3], 1
    %1907 = vsyncpa %s1906, 1

</llo_original>
